<compile_context>
chip_gen: v6e
topology: v6e:2x2x1
jax: 0.10.0
libtpu: 0.0.40
codegen_flags: <defaults>
</compile_context>

<pallas_src>
import functools

import jax
import jax.numpy as jnp
from jax.experimental import pallas as pl
from jax.experimental.pallas import tpu as pltpu


def _round_up(x, m):
    return ((x + m - 1) // m) * m


def _conv_tap_kernel(w_ref, b_ref, x_ref, h_ref, o_ref, xw_ref, acc_ref,
                     *, k, wp, tm):
    """One (m-tile, cin-tile) grid step of the fused tap-sum convolution.

    w_ref  : (K*K, Cout, tcin) bf16  per-tap weight matrices (tap-major, OIHW)
    b_ref  : (Cout, 1)  f32          bias column
    x_ref  : (tcin, tm) bf16         main flat-input tile
    h_ref  : (tcin, halo) bf16       halo window right after the main tile
    o_ref  : (Cout, tm)              lane-dense output tile
    xw_ref : (tcin, tm + halo) bf16  VMEM scratch: main ++ halo
    acc_ref: (Cout, tm) f32          VMEM accumulator across cin tiles
    """
    c = pl.program_id(1)

    @pl.when(c == 0)
    def _():
        acc_ref[...] = jnp.zeros_like(acc_ref)

    # Stitch main tile and halo into one contiguous VMEM window so every tap
    # shift is a plain (possibly lane-unaligned) slice of a single buffer.
    xw_ref[:, :tm] = x_ref[...]
    xw_ref[:, tm:] = h_ref[...]

    acc = acc_ref[...]
    for kh in range(k):
        for kw in range(k):
            tap = kh * k + kw
            shift = kh * wp + kw                         # flat-index tap shift
            acc = acc + jnp.dot(w_ref[tap], xw_ref[:, pl.ds(shift, tm)],
                                preferred_element_type=jnp.float32)
    acc_ref[...] = acc

    @pl.when(c == pl.num_programs(1) - 1)
    def _():
        o_ref[...] = (acc_ref[...] + b_ref[...]).astype(o_ref.dtype)


def conv_layer_forward(x, weight, bias, kernel_size, stride, *,
                       out_dtype=None,
                       max_tm=16384,
                       target_step_bytes=2 * 1024 * 1024,
                       max_tcin=256,
                       vmem_budget_bytes=40 * 1024 * 1024):
    """ReflectionPad2d(k//2) + Conv2d(stride) forward.

    x: (N, Cin, H, W) NCHW.  weight: (Cout, Cin, K, K) OIHW.  bias: (Cout,).
    """
    k = int(kernel_size)
    s = int(stride)
    pad = k // 2
    n, cin, h, w = x.shape
    cout = weight.shape[0]
    assert weight.shape == (cout, cin, k, k)
    out_dtype = x.dtype if out_dtype is None else out_dtype

    # Reflection padding (XLA glue, ~1x input bytes; matches nn.ReflectionPad2d).
    xp = jnp.pad(x, ((0, 0), (0, 0), (pad, pad), (pad, pad)), mode="reflect")
    hp, wp = h + 2 * pad, w + 2 * pad
    hout = (hp - k) // s + 1
    wout = (wp - k) // s + 1

    # Channel-major flat layout (Cin, N*Hp*Wp) in bf16.  For the stride-1 conv
    # on the padded image, tap (kh, kw) reads flat index q + kh*Wp + kw.
    l_total = n * hp * wp
    x_flat = jnp.transpose(xp, (1, 0, 2, 3)).reshape(cin, l_total)
    x_flat = x_flat.astype(jnp.bfloat16)

    # Cin tiling (reduction grid axis, innermost / "arbitrary").
    if cin <= max_tcin:
        tcin, cin_pad = cin, cin
    else:
        tcin = max_tcin
        cin_pad = _round_up(cin, tcin)
    n_cin = cin_pad // tcin

    # Halo: max tap shift, rounded up to a lane-aligned block so the halo view
    # is a plain Blocked BlockSpec (tm is always a multiple of halo_block).
    max_shift = (k - 1) * wp + (k - 1)
    halo_block = max(128, _round_up(max(max_shift, 1), 128))

    out_itemsize = jnp.dtype(out_dtype).itemsize

    def _vmem_bytes(tm_):
        dbuf = 2 * (tcin * tm_ * 2 + tcin * halo_block * 2
                    + cout * tm_ * out_itemsize
                    + k * k * cout * tcin * 2 + cout * 4)
        scratch = tcin * (tm_ + halo_block) * 2 + cout * tm_ * 4
        return dbuf + scratch

    # M-tile sizing: amortize ~0.35us/step, keep >=2 steps along M (v7x 2 TCs),
    # stay inside an explicit VMEM budget (v7x physical VMEM is only 64 MiB).
    tm = max(halo_block, target_step_bytes // max(1, 2 * tcin))
    tm = min(tm, max_tm)
    tm = _round_up(tm, halo_block)
    two_step_cap = max(halo_block,
                       _round_up(_round_up(l_total, halo_block) // 2, halo_block))
    tm = min(tm, two_step_cap)
    while tm > halo_block and _vmem_bytes(tm) > vmem_budget_bytes:
        tm -= halo_block
    m_pad = _round_up(l_total, tm)
    n_m = m_pad // tm

    # Pad the (un-inflated) flat input: tile-rounding tail + one halo block,
    # plus zero channels only when Cin itself is tiled.
    x_flat = jnp.pad(x_flat, ((0, cin_pad - cin),
                              (0, m_pad + halo_block - l_total)))

    # Weights tap-major (K*K, Cout, Cin) — this ordering must stay in sync with
    # the OIHW weight layout and the kh*K+kw tap indexing inside the kernel.
    w_taps = jnp.transpose(weight, (2, 3, 0, 1)).reshape(k * k, cout, cin)
    w_taps = jnp.pad(w_taps.astype(jnp.bfloat16),
                     ((0, 0), (0, 0), (0, cin_pad - cin)))
    b_col = bias.astype(jnp.float32).reshape(cout, 1)

    halo_ratio = tm // halo_block   # static int: main tile size in halo blocks

    kernel = functools.partial(_conv_tap_kernel, k=k, wp=wp, tm=tm)
    out_wide = pl.pallas_call(
        kernel,
        out_shape=jax.ShapeDtypeStruct((cout, m_pad), out_dtype),
        grid_spec=pltpu.PrefetchScalarGridSpec(
            num_scalar_prefetch=0,
            grid=(n_m, n_cin),
            in_specs=[
                pl.BlockSpec((k * k, cout, tcin), lambda j, c: (0, 0, c)),
                pl.BlockSpec((cout, 1), lambda j, c: (0, 0)),
                pl.BlockSpec((tcin, tm), lambda j, c: (c, j)),
                pl.BlockSpec((tcin, halo_block),
                             lambda j, c: (c, (j + 1) * halo_ratio)),
            ],
            out_specs=pl.BlockSpec((cout, tm), lambda j, c: (0, j)),
            scratch_shapes=[
                pltpu.VMEM((tcin, tm + halo_block), jnp.bfloat16),
                pltpu.VMEM((cout, tm), jnp.float32),
            ],
        ),
        compiler_params=pltpu.CompilerParams(
            dimension_semantics=("parallel", "arbitrary"),
            vmem_limit_bytes=int(min(max(2 * _vmem_bytes(tm), 16 << 20),
                                     48 << 20)),
        ),
    )(w_taps, b_col, x_flat, x_flat)

    # Un-flatten the stride-1 "wide" grid and keep only valid conv positions.
    wide = out_wide[:, :l_total].reshape(cout, n, hp, wp)
    out = wide[:, :, 0:(hout - 1) * s + 1:s, 0:(wout - 1) * s + 1:s]
    return jnp.transpose(out, (1, 0, 2, 3))                       # NCHW


def _reference_conv(x, weight, bias, kernel_size, stride, dtype=jnp.float32):
    pad = kernel_size // 2
    xp = jnp.pad(x, ((0, 0), (0, 0), (pad, pad), (pad, pad)), mode="reflect")
    out = jax.lax.conv_general_dilated(
        xp.astype(dtype), weight.astype(dtype),
        window_strides=(stride, stride), padding="VALID",
        dimension_numbers=("NCHW", "OIHW", "NCHW"),
        preferred_element_type=jnp.float32,
    )
    return out + bias.reshape(1, -1, 1, 1).astype(jnp.float32)


if __name__ == "__main__":
    # ConvLayer(in_channels=4, out_channels=8, kernel_size=3, stride=1)
    in_channels, out_channels, kernel_size, stride = 4, 8, 3, 1
    batch, spatial = 2, 16

    key = jax.random.PRNGKey(0)
    kx, kw, kb = jax.random.split(key, 3)

    x = jax.random.normal(kx, (batch, in_channels, spatial, spatial), jnp.float32)
    fan_in = in_channels * kernel_size * kernel_size
    weight = jax.random.normal(
        kw, (out_channels, in_channels, kernel_size, kernel_size), jnp.float32
    ) * (1.0 / jnp.sqrt(fan_in))
    bias = jax.random.normal(kb, (out_channels,), jnp.float32) * 0.01

    fwd = jax.jit(functools.partial(
        conv_layer_forward, kernel_size=kernel_size, stride=stride))
    out = jax.block_until_ready(fwd(x, weight, bias))

    assert out.shape == (batch, out_channels, spatial, spatial), out.shape

    # Same-precision check: reference conv on the same bf16 inputs, f32 accum.
    ref_bf16 = _reference_conv(x, weight, bias, kernel_size, stride,
                               dtype=jnp.bfloat16)
    assert jnp.allclose(out, ref_bf16, atol=5e-3, rtol=5e-3), float(
        jnp.max(jnp.abs(out - ref_bf16)))

    # Sanity check vs the full-f32 convolution (bf16-input-level tolerance;
    # the bf16 cast is a deliberate precision/bandwidth trade-off).
    ref_f32 = _reference_conv(x, weight, bias, kernel_size, stride)
    assert jnp.allclose(out, ref_f32, atol=5e-2, rtol=5e-2), float(
        jnp.max(jnp.abs(out - ref_f32)))

    print("KERNEL_OK")
</pallas_src>

<mosaic_0001>
module attributes {stable_mosaic.version = 11 : i64} {
  func.func @_conv_tap_kernel(%arg0: i32, %arg1: i32, %arg2: memref<9x8x4xbf16, #tpu.memory_space<vmem>>, %arg3: memref<8x1xf32, #tpu.memory_space<vmem>>, %arg4: memref<4x384xbf16, #tpu.memory_space<vmem>>, %arg5: memref<4x128xbf16, #tpu.memory_space<vmem>>, %arg6: memref<8x384xf32, #tpu.memory_space<vmem>>, %arg7: memref<4x512xbf16, #tpu.memory_space<vmem>>, %arg8: memref<8x384xf32, #tpu.memory_space<vmem>>) attributes {dimension_semantics = [#tpu.dimension_semantics<parallel>, #tpu.dimension_semantics<arbitrary>], iteration_bounds = array<i64: 2, 1>, scalar_prefetch = 0 : i64, scratch_operands = 2 : i64, tpu.core_type = #tpu.core_type<tc>, window_params = [{transform_indices = @transform_0, window_bounds = array<i64: 9, 8, 4>}, {pipeline_mode = #tpu.pipeline_mode<synchronous>, transform_indices = @transform_1, window_bounds = array<i64: 8, 1>}, {transform_indices = @transform_2, window_bounds = array<i64: 4, 384>}, {transform_indices = @transform_3, window_bounds = array<i64: 4, 128>}, {transform_indices = @transform_4, window_bounds = array<i64: 8, 384>}]} {
    %c0_i32 = arith.constant 0 : i32
    %0 = arith.cmpi eq, %arg1, %c0_i32 : i32
    %1 = arith.extui %0 : i1 to i32
    %c0_i32_0 = arith.constant 0 : i32
    %2 = arith.cmpi ne, %1, %c0_i32_0 : i32
    scf.if %2 {
      %cst_52 = arith.constant 0.000000e+00 : f32
      %57 = vector.broadcast %cst_52 : f32 to vector<8x384xf32>
      %c0_53 = arith.constant 0 : index
      %c0_54 = arith.constant 0 : index
      %58 = vector.load %arg8[%c0_53, %c0_54] : memref<8x384xf32, #tpu.memory_space<vmem>>, vector<8x384xf32>
      tpu.vector_store %arg8[%c0_53, %c0_54], %57 {strides = array<i32>} : memref<8x384xf32, #tpu.memory_space<vmem>>, vector<8x384xf32>,
    } else {
    }
    %c0 = arith.constant 0 : index
    %c0_1 = arith.constant 0 : index
    %3 = vector.load %arg4[%c0, %c0_1] : memref<4x384xbf16, #tpu.memory_space<vmem>>, vector<4x384xbf16>
    %c0_2 = arith.constant 0 : index
    %c0_3 = arith.constant 0 : index
    %4 = vector.load %arg7[%c0_2, %c0_3] : memref<4x512xbf16, #tpu.memory_space<vmem>>, vector<4x384xbf16>
    tpu.vector_store %arg7[%c0_2, %c0_3], %3 {strides = array<i32>} : memref<4x512xbf16, #tpu.memory_space<vmem>>, vector<4x384xbf16>,
    %c0_4 = arith.constant 0 : index
    %c0_5 = arith.constant 0 : index
    %5 = vector.load %arg5[%c0_4, %c0_5] : memref<4x128xbf16, #tpu.memory_space<vmem>>, vector<4x128xbf16>
    %c0_6 = arith.constant 0 : index
    %c384 = arith.constant 384 : index
    %6 = vector.load %arg7[%c0_6, %c384] : memref<4x512xbf16, #tpu.memory_space<vmem>>, vector<4x128xbf16>
    tpu.vector_store %arg7[%c0_6, %c384], %5 {strides = array<i32>} : memref<4x512xbf16, #tpu.memory_space<vmem>>, vector<4x128xbf16>,
    %c0_7 = arith.constant 0 : index
    %c0_8 = arith.constant 0 : index
    %7 = vector.load %arg8[%c0_7, %c0_8] : memref<8x384xf32, #tpu.memory_space<vmem>>, vector<8x384xf32>
    %c0_9 = arith.constant 0 : index
    %c0_10 = arith.constant 0 : index
    %c0_11 = arith.constant 0 : index
    %8 = vector.load %arg2[%c0_9, %c0_10, %c0_11] : memref<9x8x4xbf16, #tpu.memory_space<vmem>>, vector<1x8x4xbf16>
    %9 = vector.shape_cast %8 : vector<1x8x4xbf16> to vector<8x4xbf16>
    %c0_12 = arith.constant 0 : index
    %c0_13 = arith.constant 0 : index
    %10 = vector.load %arg7[%c0_12, %c0_13] : memref<4x512xbf16, #tpu.memory_space<vmem>>, vector<4x384xbf16>
    %cst = arith.constant dense<0.000000e+00> : vector<8x384xf32>
    %11 = tpu.matmul %9, %10, %cst {dimension_numbers = #tpu.dot_dimension_numbers<[1], [0], [0], [1], [0, 0, 1, 1], [], []>} : vector<8x4xbf16>, vector<4x384xbf16>, vector<8x384xf32> -> vector<8x384xf32>
    %12 = arith.addf %7, %11 : vector<8x384xf32>
    %c1 = arith.constant 1 : index
    %c0_14 = arith.constant 0 : index
    %c0_15 = arith.constant 0 : index
    %13 = vector.load %arg2[%c1, %c0_14, %c0_15] : memref<9x8x4xbf16, #tpu.memory_space<vmem>>, vector<1x8x4xbf16>
    %14 = vector.shape_cast %13 : vector<1x8x4xbf16> to vector<8x4xbf16>
    %c0_16 = arith.constant 0 : index
    %c1_17 = arith.constant 1 : index
    %15 = vector.load %arg7[%c0_16, %c1_17] : memref<4x512xbf16, #tpu.memory_space<vmem>>, vector<4x384xbf16>
    %cst_18 = arith.constant dense<0.000000e+00> : vector<8x384xf32>
    %16 = tpu.matmul %14, %15, %cst_18 {dimension_numbers = #tpu.dot_dimension_numbers<[1], [0], [0], [1], [0, 0, 1, 1], [], []>} : vector<8x4xbf16>, vector<4x384xbf16>, vector<8x384xf32> -> vector<8x384xf32>
    %17 = arith.addf %12, %16 : vector<8x384xf32>
    %c2 = arith.constant 2 : index
    %c0_19 = arith.constant 0 : index
    %c0_20 = arith.constant 0 : index
    %18 = vector.load %arg2[%c2, %c0_19, %c0_20] : memref<9x8x4xbf16, #tpu.memory_space<vmem>>, vector<1x8x4xbf16>
    %19 = vector.shape_cast %18 : vector<1x8x4xbf16> to vector<8x4xbf16>
    %c0_21 = arith.constant 0 : index
    %c2_22 = arith.constant 2 : index
    %20 = vector.load %arg7[%c0_21, %c2_22] : memref<4x512xbf16, #tpu.memory_space<vmem>>, vector<4x384xbf16>
    %cst_23 = arith.constant dense<0.000000e+00> : vector<8x384xf32>
    %21 = tpu.matmul %19, %20, %cst_23 {dimension_numbers = #tpu.dot_dimension_numbers<[1], [0], [0], [1], [0, 0, 1, 1], [], []>} : vector<8x4xbf16>, vector<4x384xbf16>, vector<8x384xf32> -> vector<8x384xf32>
    %22 = arith.addf %17, %21 : vector<8x384xf32>
    %c3 = arith.constant 3 : index
    %c0_24 = arith.constant 0 : index
    %c0_25 = arith.constant 0 : index
    %23 = vector.load %arg2[%c3, %c0_24, %c0_25] : memref<9x8x4xbf16, #tpu.memory_space<vmem>>, vector<1x8x4xbf16>
    %24 = vector.shape_cast %23 : vector<1x8x4xbf16> to vector<8x4xbf16>
    %c0_26 = arith.constant 0 : index
    %c18 = arith.constant 18 : index
    %25 = vector.load %arg7[%c0_26, %c18] : memref<4x512xbf16, #tpu.memory_space<vmem>>, vector<4x384xbf16>
    %cst_27 = arith.constant dense<0.000000e+00> : vector<8x384xf32>
    %26 = tpu.matmul %24, %25, %cst_27 {dimension_numbers = #tpu.dot_dimension_numbers<[1], [0], [0], [1], [0, 0, 1, 1], [], []>} : vector<8x4xbf16>, vector<4x384xbf16>, vector<8x384xf32> -> vector<8x384xf32>
    %27 = arith.addf %22, %26 : vector<8x384xf32>
    %c4 = arith.constant 4 : index
    %c0_28 = arith.constant 0 : index
    %c0_29 = arith.constant 0 : index
    %28 = vector.load %arg2[%c4, %c0_28, %c0_29] : memref<9x8x4xbf16, #tpu.memory_space<vmem>>, vector<1x8x4xbf16>
    %29 = vector.shape_cast %28 : vector<1x8x4xbf16> to vector<8x4xbf16>
    %c0_30 = arith.constant 0 : index
    %c19 = arith.constant 19 : index
    %30 = vector.load %arg7[%c0_30, %c19] : memref<4x512xbf16, #tpu.memory_space<vmem>>, vector<4x384xbf16>
    %cst_31 = arith.constant dense<0.000000e+00> : vector<8x384xf32>
    %31 = tpu.matmul %29, %30, %cst_31 {dimension_numbers = #tpu.dot_dimension_numbers<[1], [0], [0], [1], [0, 0, 1, 1], [], []>} : vector<8x4xbf16>, vector<4x384xbf16>, vector<8x384xf32> -> vector<8x384xf32>
    %32 = arith.addf %27, %31 : vector<8x384xf32>
    %c5 = arith.constant 5 : index
    %c0_32 = arith.constant 0 : index
    %c0_33 = arith.constant 0 : index
    %33 = vector.load %arg2[%c5, %c0_32, %c0_33] : memref<9x8x4xbf16, #tpu.memory_space<vmem>>, vector<1x8x4xbf16>
    %34 = vector.shape_cast %33 : vector<1x8x4xbf16> to vector<8x4xbf16>
    %c0_34 = arith.constant 0 : index
    %c20 = arith.constant 20 : index
    %35 = vector.load %arg7[%c0_34, %c20] : memref<4x512xbf16, #tpu.memory_space<vmem>>, vector<4x384xbf16>
    %cst_35 = arith.constant dense<0.000000e+00> : vector<8x384xf32>
    %36 = tpu.matmul %34, %35, %cst_35 {dimension_numbers = #tpu.dot_dimension_numbers<[1], [0], [0], [1], [0, 0, 1, 1], [], []>} : vector<8x4xbf16>, vector<4x384xbf16>, vector<8x384xf32> -> vector<8x384xf32>
    %37 = arith.addf %32, %36 : vector<8x384xf32>
    %c6 = arith.constant 6 : index
    %c0_36 = arith.constant 0 : index
    %c0_37 = arith.constant 0 : index
    %38 = vector.load %arg2[%c6, %c0_36, %c0_37] : memref<9x8x4xbf16, #tpu.memory_space<vmem>>, vector<1x8x4xbf16>
    %39 = vector.shape_cast %38 : vector<1x8x4xbf16> to vector<8x4xbf16>
    %c0_38 = arith.constant 0 : index
    %c36 = arith.constant 36 : index
    %40 = vector.load %arg7[%c0_38, %c36] : memref<4x512xbf16, #tpu.memory_space<vmem>>, vector<4x384xbf16>
    %cst_39 = arith.constant dense<0.000000e+00> : vector<8x384xf32>
    %41 = tpu.matmul %39, %40, %cst_39 {dimension_numbers = #tpu.dot_dimension_numbers<[1], [0], [0], [1], [0, 0, 1, 1], [], []>} : vector<8x4xbf16>, vector<4x384xbf16>, vector<8x384xf32> -> vector<8x384xf32>
    %42 = arith.addf %37, %41 : vector<8x384xf32>
    %c7 = arith.constant 7 : index
    %c0_40 = arith.constant 0 : index
    %c0_41 = arith.constant 0 : index
    %43 = vector.load %arg2[%c7, %c0_40, %c0_41] : memref<9x8x4xbf16, #tpu.memory_space<vmem>>, vector<1x8x4xbf16>
    %44 = vector.shape_cast %43 : vector<1x8x4xbf16> to vector<8x4xbf16>
    %c0_42 = arith.constant 0 : index
    %c37 = arith.constant 37 : index
    %45 = vector.load %arg7[%c0_42, %c37] : memref<4x512xbf16, #tpu.memory_space<vmem>>, vector<4x384xbf16>
    %cst_43 = arith.constant dense<0.000000e+00> : vector<8x384xf32>
    %46 = tpu.matmul %44, %45, %cst_43 {dimension_numbers = #tpu.dot_dimension_numbers<[1], [0], [0], [1], [0, 0, 1, 1], [], []>} : vector<8x4xbf16>, vector<4x384xbf16>, vector<8x384xf32> -> vector<8x384xf32>
    %47 = arith.addf %42, %46 : vector<8x384xf32>
    %c8 = arith.constant 8 : index
    %c0_44 = arith.constant 0 : index
    %c0_45 = arith.constant 0 : index
    %48 = vector.load %arg2[%c8, %c0_44, %c0_45] : memref<9x8x4xbf16, #tpu.memory_space<vmem>>, vector<1x8x4xbf16>
    %49 = vector.shape_cast %48 : vector<1x8x4xbf16> to vector<8x4xbf16>
    %c0_46 = arith.constant 0 : index
    %c38 = arith.constant 38 : index
    %50 = vector.load %arg7[%c0_46, %c38] : memref<4x512xbf16, #tpu.memory_space<vmem>>, vector<4x384xbf16>
    %cst_47 = arith.constant dense<0.000000e+00> : vector<8x384xf32>
    %51 = tpu.matmul %49, %50, %cst_47 {dimension_numbers = #tpu.dot_dimension_numbers<[1], [0], [0], [1], [0, 0, 1, 1], [], []>} : vector<8x4xbf16>, vector<4x384xbf16>, vector<8x384xf32> -> vector<8x384xf32>
    %52 = arith.addf %47, %51 : vector<8x384xf32>
    %c0_48 = arith.constant 0 : index
    %c0_49 = arith.constant 0 : index
    %53 = vector.load %arg8[%c0_48, %c0_49] : memref<8x384xf32, #tpu.memory_space<vmem>>, vector<8x384xf32>
    tpu.vector_store %arg8[%c0_48, %c0_49], %52 {strides = array<i32>} : memref<8x384xf32, #tpu.memory_space<vmem>>, vector<8x384xf32>,
    %c0_i32_50 = arith.constant 0 : i32
    %54 = arith.cmpi eq, %arg1, %c0_i32_50 : i32
    %55 = arith.extui %54 : i1 to i32
    %c0_i32_51 = arith.constant 0 : i32
    %56 = arith.cmpi ne, %55, %c0_i32_51 : i32
    scf.if %56 {
      %c0_52 = arith.constant 0 : index
      %c0_53 = arith.constant 0 : index
      %57 = vector.load %arg8[%c0_52, %c0_53] : memref<8x384xf32, #tpu.memory_space<vmem>>, vector<8x384xf32>
      %c0_54 = arith.constant 0 : index
      %c0_55 = arith.constant 0 : index
      %58 = vector.load %arg3[%c0_54, %c0_55] : memref<8x1xf32, #tpu.memory_space<vmem>>, vector<8x1xf32>
      %59 = vector.broadcast %58 : vector<8x1xf32> to vector<8x384xf32>
      %60 = arith.addf %57, %59 : vector<8x384xf32>
      %c0_56 = arith.constant 0 : index
      %c0_57 = arith.constant 0 : index
      %61 = vector.load %arg6[%c0_56, %c0_57] : memref<8x384xf32, #tpu.memory_space<vmem>>, vector<8x384xf32>
      tpu.vector_store %arg6[%c0_56, %c0_57], %60 {strides = array<i32>} : memref<8x384xf32, #tpu.memory_space<vmem>>, vector<8x384xf32>,
    } else {
    }
    return
  }
  func.func @transform_0(%arg0: i32, %arg1: i32) -> (i32, i32, i32) {
    %c0_i32 = arith.constant 0 : i32
    %c0_i32_0 = arith.constant 0 : i32
    %c0_i32_1 = arith.constant 0 : i32
    return %c0_i32, %c0_i32_0, %arg1 : i32, i32, i32
  }
  func.func @transform_1(%arg0: i32, %arg1: i32) -> (i32, i32) {
    %c0_i32 = arith.constant 0 : i32
    %c0_i32_0 = arith.constant 0 : i32
    %c0_i32_1 = arith.constant 0 : i32
    return %c0_i32, %c0_i32_0 : i32, i32
  }
  func.func @transform_2(%arg0: i32, %arg1: i32) -> (i32, i32) {
    %c0_i32 = arith.constant 0 : i32
    return %arg1, %arg0 : i32, i32
  }
  func.func @transform_3(%arg0: i32, %arg1: i32) -> (i32, i32) {
    %c1_i32 = arith.constant 1 : i32
    %0 = arith.addi %arg0, %c1_i32 : i32
    %c3_i32 = arith.constant 3 : i32
    %1 = arith.muli %0, %c3_i32 : i32
    %c0_i32 = arith.constant 0 : i32
    return %arg1, %1 : i32, i32
  }
  func.func @transform_4(%arg0: i32, %arg1: i32) -> (i32, i32) {
    %c0_i32 = arith.constant 0 : i32
    %c0_i32_0 = arith.constant 0 : i32
    return %c0_i32, %arg0 : i32, i32
  }
}

</mosaic_0001>

<llo_original>
// kernel: conv_layer_forward.1
$region0: #{conv_layer_forward.1}
  #allocation0 [shape = 'u32[]', space=smem, size = 0x4, offset = 0x4, fixed_abs, tag = 'smem constant byte address 0x4 - core index']
  #allocation1 [shape = 'u32[144,128]{1,0:T(1,128)}', space=vmem, size = 0x12000, scoped, tag = 'internal scratch']
  #allocation2 [shape = 'bf16[4,512]{1,0:T(4,128)(2,1)}', space=vmem, size = 0x1000, scoped, tag = 'scratch operand']
  #allocation3 [shape = 'f32[8,384]{1,0:T(8,128)}', space=vmem, size = 0x3000, scoped, tag = 'scratch operand']
  %s0 = inlined_call_operand.vmem [shape: bf16[9,8,4], index: 0, kind: input, shape index: {}]
  %s1 = inlined_call_operand.vmem [shape: f32[8,1], index: 1, kind: input, shape index: {}]
  %s2 = inlined_call_operand.vmem [shape: bf16[4,896], index: 2, kind: input, shape index: {}, may-alias: {2,3}]
  %s3 = inlined_call_operand.vmem [shape: bf16[4,896], index: 3, kind: input, shape index: {}, may-alias: {2,3}]
  %s4 = inlined_call_operand.vmem [shape: f32[8,768], index: 4, kind: output, shape index: {}]
  %s5 = sld [smem:[#allocation0]]
  $region57: #{conv_layer_forward.1} parent=0
    _
  %s7 = ssub.s32 1, %s5
  %s8 = scalar_select 0, %s7, %s5
  loop: start=0, step=1, limit=4
  $region2: #{conv_layer_forward.1} parent=0 // loop_pre_header
    _
  $region3: #{conv_layer_forward.1} parent=0 // loop_header
    %s10 = sphi 0, %s14
    %p11 = scmp.ge.s32.totalorder %s10, 4
    %s17 = sphi 0, %s29
    %s18 = sphi 0, %s25
    %s19 = sphi 0, %s17
    %s20 = sphi 0, %s18
    %s21 = sphi 0, %s19
    %s22 = sphi 0, %s20
    %s32 = sphi 0, %s34
    %s35 = sphi 0, %s32
    %s36 = sphi 0, %s35
    %s52 = sphi 0, %s36
    %s56 = sphi 0, %s56
    %s58 = sphi 0, %s56
    %s59 = sphi 0, %s58
    %s73 = sphi 0, %s59
    %s81 = sphi 0, %s83
    %s84 = sphi 0, %s81
    %s85 = sphi 0, %s84
    %s101 = sphi 0, %s85
    %s113 = sphi 0, %s115
    %s116 = sphi 0, %s113
    %s117 = sphi 0, %s116
    %s133 = sphi 0, %s117
    %s139 = sphi 0, %s141
    %s142 = sphi 0, %s139
    %s143 = sphi 0, %s142
    %s159 = sphi 0, %s143
  $region4: #{conv_layer_forward.1} parent=0 // loop_header_branch
    %13 = sbr.rel (%p11) target = $region8
  $region5: #{conv_layer_forward.1} parent=0 // loop_body
    %s15 = ssub.s32 %s10, 1
    %s16 = ssub.s32 %s10, 2
    %s23 = sadd.s32 1, %s18
    %p24 = scmp.ge.s32.totalorder %s23, 1
    %s25 = scalar_select %p24, 0, %s23
    %s26 = sadd.s32 1, %s17
    %s27 = scalar_select %p24, %s26, %s17
    %p28 = scmp.ge.s32.totalorder %s27, 2
    %s29 = scalar_select %p28, 0, %s27
    %s30 = ssub.s32 %s18, %s25
    %p31 = scmp.eq.s32.totalorder %s30, 0
    %s33 = sadd.s32 %s32, 1
    %s34 = scalar_select %p31, %s32, %s33
    %p37 = pneg %p31
    %p38 = scmp.eq.s32.totalorder %s10, 1
    %p39 = por %p37, %p38
    %p40 = scmp.ne.s32.totalorder %s32, %s35
    %p41 = scmp.eq.s32.totalorder %s10, 0
    %p42 = por %p40, %p41
    %p43 = scmp.ne.s32.totalorder %s32, %s35
    %p44 = scmp.eq.s32.totalorder %s15, 1
    %p45 = por %p43, %p44
    %p46 = scmp.ne.s32.totalorder %s35, %s36
    %p47 = scmp.eq.s32.totalorder %s15, 0
    %p48 = por %p46, %p47
    %p49 = scmp.ne.s32.totalorder %s35, %s36
    %p50 = scmp.eq.s32.totalorder %s16, 1
    %p51 = por %p49, %p50
    %p53 = scmp.ne.s32.totalorder %s36, %s52
    %p54 = scmp.eq.s32.totalorder %s16, 0
    %p55 = por %p53, %p54
    %s57 = sadd.s32 %s56, 1
    %p60 = scmp.eq.s32.totalorder %s10, 1
    %p61 = scmp.ne.s32.totalorder %s56, %s58
    %p62 = scmp.eq.s32.totalorder %s10, 0
    %p63 = por %p61, %p62
    %p64 = scmp.ne.s32.totalorder %s56, %s58
    %p65 = scmp.eq.s32.totalorder %s15, 1
    %p66 = por %p64, %p65
    %p67 = scmp.ne.s32.totalorder %s58, %s59
    %p68 = scmp.eq.s32.totalorder %s15, 0
    %p69 = por %p67, %p68
    %p70 = scmp.ne.s32.totalorder %s58, %s59
    %p71 = scmp.eq.s32.totalorder %s16, 1
    %p72 = por %p70, %p71
    %p74 = scmp.ne.s32.totalorder %s59, %s73
    %p75 = scmp.eq.s32.totalorder %s16, 0
    %p76 = por %p74, %p75
    %s77 = ssub.s32 %s18, %s25
    %s78 = ssub.s32 %s17, %s29
    %s79 = sor.u32 %s77, %s78
    %p80 = scmp.eq.s32.totalorder %s79, 0
    %s82 = sadd.s32 %s81, 1
    %s83 = scalar_select %p80, %s81, %s82
    %p86 = pneg %p80
    %p87 = scmp.eq.s32.totalorder %s10, 1
    %p88 = por %p86, %p87
    %p89 = scmp.ne.s32.totalorder %s81, %s84
    %p90 = scmp.eq.s32.totalorder %s10, 0
    %p91 = por %p89, %p90
    %p92 = scmp.ne.s32.totalorder %s81, %s84
    %p93 = scmp.eq.s32.totalorder %s15, 1
    %p94 = por %p92, %p93
    %p95 = scmp.ne.s32.totalorder %s84, %s85
    %p96 = scmp.eq.s32.totalorder %s15, 0
    %p97 = por %p95, %p96
    %p98 = scmp.ne.s32.totalorder %s84, %s85
    %p99 = scmp.eq.s32.totalorder %s16, 1
    %p100 = por %p98, %p99
    %p102 = scmp.ne.s32.totalorder %s85, %s101
    %p103 = scmp.eq.s32.totalorder %s16, 0
    %p104 = por %p102, %p103
    %s105 = sadd.s32 %s17, 1
    %s106 = smul.u32 %s105, 3
    %s107 = sadd.s32 %s29, 1
    %s108 = smul.u32 %s107, 3
    %s109 = ssub.s32 %s18, %s25
    %s110 = ssub.s32 %s106, %s108
    %s111 = sor.u32 %s109, %s110
    %p112 = scmp.eq.s32.totalorder %s111, 0
    %s114 = sadd.s32 %s113, 1
    %s115 = scalar_select %p112, %s113, %s114
    %p118 = pneg %p112
    %p119 = scmp.eq.s32.totalorder %s10, 1
    %p120 = por %p118, %p119
    %p121 = scmp.ne.s32.totalorder %s113, %s116
    %p122 = scmp.eq.s32.totalorder %s10, 0
    %p123 = por %p121, %p122
    %p124 = scmp.ne.s32.totalorder %s113, %s116
    %p125 = scmp.eq.s32.totalorder %s15, 1
    %p126 = por %p124, %p125
    %p127 = scmp.ne.s32.totalorder %s116, %s117
    %p128 = scmp.eq.s32.totalorder %s15, 0
    %p129 = por %p127, %p128
    %p130 = scmp.ne.s32.totalorder %s116, %s117
    %p131 = scmp.eq.s32.totalorder %s16, 1
    %p132 = por %p130, %p131
    %p134 = scmp.ne.s32.totalorder %s117, %s133
    %p135 = scmp.eq.s32.totalorder %s16, 0
    %p136 = por %p134, %p135
    %s137 = ssub.s32 %s17, %s29
    %p138 = scmp.eq.s32.totalorder %s137, 0
    %s140 = sadd.s32 %s139, 1
    %s141 = scalar_select %p138, %s139, %s140
    %p144 = pneg %p138
    %p145 = scmp.eq.s32.totalorder %s10, 1
    %p146 = por %p144, %p145
    %p147 = scmp.ne.s32.totalorder %s139, %s142
    %p148 = scmp.eq.s32.totalorder %s10, 0
    %p149 = por %p147, %p148
    %p150 = scmp.ne.s32.totalorder %s139, %s142
    %p151 = scmp.eq.s32.totalorder %s15, 1
    %p152 = por %p150, %p151
    %p153 = scmp.ne.s32.totalorder %s142, %s143
    %p154 = scmp.eq.s32.totalorder %s15, 0
    %p155 = por %p153, %p154
    %p156 = scmp.ne.s32.totalorder %s142, %s143
    %p157 = scmp.eq.s32.totalorder %s16, 1
    %p158 = por %p156, %p157
    %p160 = scmp.ne.s32.totalorder %s143, %s159
    %p161 = scmp.eq.s32.totalorder %s16, 0
    %p162 = por %p160, %p161
    %p163 = scmp.le.s32.totalorder 1, %s10
    %p164 = scmp.lt.s32.totalorder %s10, 3
    %p165 = pnand %p163, %p164
    %p166 = pneg %p165
    // Predicated region
    $region9: #{conv_layer_forward.1} parent=5 // pred_check
      _
    $region10: #{conv_layer_forward.1} parent=5 // pred_check_branch
      %168 = sbr.rel (%p165) target = $region12
    $region11: #{conv_layer_forward.1} parent=5 // pred_region
      %s169 = ssub.s32 %s10, 1
      // Predicated region
      $region13: #{conv_layer_forward.1} parent=11 // pred_check
        %p170 = pneg %p48
      $region14: #{conv_layer_forward.1} parent=11 // pred_check_branch
        %172 = sbr.rel (%p170) target = $region16
      $region15: #{conv_layer_forward.1} parent=11 // pred_region
        %p173 = scmp.lt.s32.totalorder %s20, 0
        %s174 = scalar_select %p173, %s20, 0
        %s175 = smul.addr %s174, 4
        %s176 = scalar_lea.vmem %s0, %s175
      $region16: #{conv_layer_forward.1} parent=11 // pred_fallthru
        _
      // Predicated region
      $region17: #{conv_layer_forward.1} parent=11 // pred_check
        %p177 = pneg %p69
      $region18: #{conv_layer_forward.1} parent=11 // pred_check_branch
        %179 = sbr.rel (%p177) target = $region20
      $region19: #{conv_layer_forward.1} parent=11 // pred_region
        _
      $region20: #{conv_layer_forward.1} parent=11 // pred_fallthru
        _
    $region12: #{conv_layer_forward.1} parent=5 // pred_fallthru
      _
    %p180 = scmp.lt.s32.totalorder %s10, 2
    // Predicated region
    $region21: #{conv_layer_forward.1} parent=5 // pred_check
      %p181 = pneg %p180
    $region22: #{conv_layer_forward.1} parent=5 // pred_check_branch
      %183 = sbr.rel (%p181) target = $region24
    $region23: #{conv_layer_forward.1} parent=5 // pred_region
      // Predicated region
      $region25: #{conv_layer_forward.1} parent=23 // pred_check
        %p184 = pneg %p91
      $region26: #{conv_layer_forward.1} parent=23 // pred_check_branch
        %186 = sbr.rel (%p184) target = $region28
      $region27: #{conv_layer_forward.1} parent=23 // pred_region
        %s187 = smul.u32 3, %s17
        %s188 = ssub.s32 7, %s187
        %p189 = scmp.lt.s32.totalorder %s188, 3
        %s190 = scalar_select %p189, %s188, 3
        %s191 = smul.u32 32, %s190
        %p192 = scmp.lt.s32.totalorder %s18, 0
        %s193 = scalar_select %p192, %s18, 0
        %p194 = scmp.lt.s32.totalorder %s187, 6
        %s195 = scalar_select %p194, %s187, 6
        %s196 = smul.addr %s193, 7
        %s197 = sadd.s32 %s195, %s196
        %s198 = smul.addr %s197, 2
        %s199 = scalar_lea.vmem %s2, %s198
        %s200 = smul.u32 3, %s17
        %s201 = ssub.s32 7, %s200
        %p202 = scmp.lt.s32.totalorder %s201, 3
        %s203 = scalar_select %p202, %s201, 3
        %s204 = smul.u32 32, %s203
      $region28: #{conv_layer_forward.1} parent=23 // pred_fallthru
        _
      // Predicated region
      $region29: #{conv_layer_forward.1} parent=23 // pred_check
        %p205 = pneg %p123
      $region30: #{conv_layer_forward.1} parent=23 // pred_check_branch
        %207 = sbr.rel (%p205) target = $region32
      $region31: #{conv_layer_forward.1} parent=23 // pred_region
        %s208 = sadd.s32 %s17, 1
        %s209 = smul.u32 %s208, 3
        %p210 = scmp.lt.s32.totalorder %s18, 0
        %s211 = scalar_select %p210, %s18, 0
        %p212 = scmp.lt.s32.totalorder %s209, 6
        %s213 = scalar_select %p212, %s209, 6
        %s214 = smul.addr %s211, 7
        %s215 = sadd.s32 %s213, %s214
        %s216 = smul.addr %s215, 2
        %s217 = scalar_lea.vmem %s3, %s216
        %s218 = sadd.s32 %s17, 1
        %s219 = smul.u32 %s218, 3
      $region32: #{conv_layer_forward.1} parent=23 // pred_fallthru
        _
    $region24: #{conv_layer_forward.1} parent=5 // pred_fallthru
      _
    %p220 = scmp.le.s32.totalorder 1, %s10
    %p221 = scmp.lt.s32.totalorder %s10, 3
    %p222 = pnand %p220, %p221
    %p223 = pneg %p222
    // Predicated region
    $region33: #{conv_layer_forward.1} parent=5 // pred_check
      _
    $region34: #{conv_layer_forward.1} parent=5 // pred_check_branch
      %225 = sbr.rel (%p222) target = $region36
    $region35: #{conv_layer_forward.1} parent=5 // pred_region
      %s226 = ssub.s32 %s10, 1
      %p227 = scmp.lt.s32.totalorder %s20, 0
      %s228 = scalar_select %p227, %s20, 0
      %s229 = smul.addr %s228, 4
      %s230 = scalar_lea.vmem %s0, %s229
      %p231 = pneg %p48
      %p232 = pneg %p45
      %p233 = pneg %p69
      %p234 = pneg %p66
      %s235 = smul.u32 3, %s19
      %s236 = ssub.s32 7, %s235
      %p237 = scmp.lt.s32.totalorder %s236, 3
      %s238 = scalar_select %p237, %s236, 3
      %s239 = smul.u32 32, %s238
      %p240 = scmp.lt.s32.totalorder %s20, 0
      %s241 = scalar_select %p240, %s20, 0
      %p242 = scmp.lt.s32.totalorder %s235, 6
      %s243 = scalar_select %p242, %s235, 6
      %s244 = smul.addr %s241, 7
      %s245 = sadd.s32 %s243, %s244
      %s246 = smul.addr %s245, 2
      %s247 = scalar_lea.vmem %s2, %s246
      %p248 = pneg %p97
      %p249 = pneg %p94
      %s250 = sadd.s32 %s19, 1
      %s251 = smul.u32 %s250, 3
      %p252 = scmp.lt.s32.totalorder %s20, 0
      %s253 = scalar_select %p252, %s20, 0
      %p254 = scmp.lt.s32.totalorder %s251, 6
      %s255 = scalar_select %p254, %s251, 6
      %s256 = smul.addr %s253, 7
      %s257 = sadd.s32 %s255, %s256
      %s258 = smul.addr %s257, 2
      %s259 = scalar_lea.vmem %s3, %s258
      %p260 = pneg %p129
      %p261 = pneg %p126
      %p262 = pneg %p155
      %p263 = pneg %p152
      %s264 = smul.u32 3, %s19
      %p265 = scmp.lt.s32.totalorder %s264, 5
      %s266 = scalar_select %p265, %s264, 5
      %s267 = smul.addr %s266, 8
      %s268 = scalar_lea.vmem %s4, %s267
      %p269 = scmp.lt.s32.totalorder %s20, 0
      %s270 = scalar_select %p269, %s20, 0
      %s271 = smul.addr %s270, 4
      %s272 = scalar_lea.vmem %s0, %s271
      %s273 = smul.u32 3, %s19
      %s274 = ssub.s32 7, %s273
      %p275 = scmp.lt.s32.totalorder %s274, 3
      %s276 = scalar_select %p275, %s274, 3
      %s277 = smul.u32 32, %s276
      %p278 = scmp.lt.s32.totalorder %s20, 0
      %s279 = scalar_select %p278, %s20, 0
      %p280 = scmp.lt.s32.totalorder %s273, 6
      %s281 = scalar_select %p280, %s273, 6
      %s282 = smul.addr %s279, 7
      %s283 = sadd.s32 %s281, %s282
      %s284 = smul.addr %s283, 2
      %s285 = scalar_lea.vmem %s2, %s284
      %s286 = smul.u32 3, %s19
      %s287 = ssub.s32 7, %s286
      %p288 = scmp.lt.s32.totalorder %s287, 3
      %s289 = scalar_select %p288, %s287, 3
      %s290 = smul.u32 32, %s289
      %s291 = sadd.s32 %s19, 1
      %s292 = smul.u32 %s291, 3
      %p293 = scmp.lt.s32.totalorder %s20, 0
      %s294 = scalar_select %p293, %s20, 0
      %p295 = scmp.lt.s32.totalorder %s292, 6
      %s296 = scalar_select %p295, %s292, 6
      %s297 = smul.addr %s294, 7
      %s298 = sadd.s32 %s296, %s297
      %s299 = smul.addr %s298, 2
      %s300 = scalar_lea.vmem %s3, %s299
      %s301 = sadd.s32 %s19, 1
      %s302 = smul.u32 %s301, 3
      %s303 = smul.u32 3, %s19
      %p304 = scmp.lt.s32.totalorder %s303, 5
      %s305 = scalar_select %p304, %s303, 5
      %s306 = smul.addr %s305, 8
      %s307 = scalar_lea.vmem %s4, %s306
      %s308 = smul.u32 3, %s19
      %p310 = scmp.eq.s32.totalorder %s20, 0
      // Predicated region
      $region37: #{conv_layer_forward.1} parent=35 // pred_check
        %p311 = pneg %p310
      $region38: #{conv_layer_forward.1} parent=35 // pred_check_branch
        %313 = sbr.rel (%p311) target = $region40
      $region39: #{conv_layer_forward.1} parent=35 // pred_region
        %314 = vst [vmem:[#allocation3] sm:$0xff] 0.0
        %315 = vst [vmem:[#allocation3 + $0x8] sm:$0xff] 0.0
        %316 = vst [vmem:[#allocation3 + $0x10] sm:$0xff] 0.0
      $region40: #{conv_layer_forward.1} parent=35 // pred_fallthru
        _
      %v317 = vld [vmem:[%s285] sm:$0x3f]
      %318 = vst [vmem:[#allocation2] sm:$0x3f] %v317
      %v319 = vld [vmem:[%s300] sm:$0x3]
      %320 = vst [vmem:[#allocation2 + $0x6] sm:$0x3] %v319
      %v321 = vld [vmem:[#allocation3] sm:$0xff]
      %v322 = vld [vmem:[#allocation3 + $0x8] sm:$0xff]
      %v323 = vld [vmem:[#allocation3 + $0x10] sm:$0xff]
      %v324 = vld [vmem:[%s272] sm:$0xf]
      %v325 = vld [vmem:[#allocation2] sm:$0x3f]
      %v327 = vcombine.high %v325, %v325
      %v329 = vunpack.c.l.s4 1983009808
      %v330 = vunpack.c.0.s8 %v329
      %v331 = vlaneseq
      %v332 = vshrl.u32 %v331, 7
      %v333 = vsub.s32 %v330, %v332
      %v334 = vrot.slane %v325, %v333
      %v336 = vunpack.c.l.s4 1983009808
      %v337 = vunpack.c.0.s8 %v336
      %v338 = vlaneseq
      %v339 = vshrl.u32 %v338, 7
      %v340 = vsub.s32 %v337, %v339
      %v341 = vrot.slane %v327, %v340
      %v342 = vcombine.high %v334, %v334
      %vm343 = vcmask 31744
      %v345 = vsel %vm343, %v324, 0
      %vm347 = vcmask 1041408
      %v349 = vsel %vm347, %v334, 0
      %v352 = vsel %vm347, %v342, 0
      %v355 = vsel %vm347, %v341, 0
      %357 = vmatprep.subr.bf16.mxu0 0
      %358 = vmatpush1.bf16.msra.mxu0 0
      %359 = vmatprep.subr.bf16.mxu0 0
      %360 = vmatpush1.bf16.msra.mxu0 0
      %361 = vmatprep.subr.bf16.mxu0 0
      %362 = vmatpush1.bf16.msra.mxu0 0
      %363 = vmatprep.subr.bf16.mxu0 0
      %364 = vmatpush1.bf16.msra.mxu0 0
      %365 = vmatprep.subr.bf16.mxu0 0
      %366 = vmatpush1.bf16.msra.mxu0 0
      %367 = vmatprep.subr.bf16.mxu0 0
      %368 = vmatpush1.bf16.msra.mxu0 0
      %369 = vmatprep.subr.bf16.mxu0 0
      %370 = vmatpush1.bf16.msra.mxu0 0
      %371 = vmatprep.subr.bf16.mxu0 %v352
      %372 = vmatpush1.bf16.msra.mxu0 %v349
      %373 = vmatprep.subr.bf16.mxu0 0
      %374 = vmatpush2.bf16.msra.mxu0 0
      %375 = vmatprep.subr.bf16.mxu0 0
      %376 = vmatpush2.bf16.msra.mxu0 0
      %377 = vmatprep.subr.bf16.mxu0 0
      %378 = vmatpush2.bf16.msra.mxu0 0
      %379 = vmatprep.subr.bf16.mxu0 0
      %380 = vmatpush2.bf16.msra.mxu0 0
      %381 = vmatprep.subr.bf16.mxu0 0
      %382 = vmatpush2.bf16.msra.mxu0 0
      %383 = vmatprep.subr.bf16.mxu0 0
      %384 = vmatpush2.bf16.msra.mxu0 0
      %385 = vmatprep.subr.bf16.mxu0 0
      %386 = vmatpush2.bf16.msra.mxu0 0
      %387 = vmatprep.subr.bf16.mxu0 0
      %388 = vmatpush2.bf16.msra.mxu0 0
      %389 = vmatprep.mubr.bf16.mxu0 0
      %390 = vmatmul.mubr.bf16.gmra.mxu0 %v345
      %v391 = vpop.f32.mrf.mxu0
      %v392 = vadd.f32 0.0, %v391
      %v393 = vpop.f32.mrf.mxu0
      %v394 = vadd.f32 0.0, %v393
      %v395 = vpop.f32.mrf.mxu0
      %v396 = vpop.f32.mrf.mxu0
      %397 = vdwg.mxu0
      %398 = vmatprep.subr.bf16.mxu0 0
      %399 = vmatpush1.bf16.msra.mxu0 0
      %400 = vmatprep.subr.bf16.mxu0 0
      %401 = vmatpush1.bf16.msra.mxu0 0
      %402 = vmatprep.subr.bf16.mxu0 0
      %403 = vmatpush1.bf16.msra.mxu0 0
      %404 = vmatprep.subr.bf16.mxu0 0
      %405 = vmatpush1.bf16.msra.mxu0 0
      %406 = vmatprep.subr.bf16.mxu0 0
      %407 = vmatpush1.bf16.msra.mxu0 0
      %408 = vmatprep.subr.bf16.mxu0 0
      %409 = vmatpush1.bf16.msra.mxu0 0
      %410 = vmatprep.subr.bf16.mxu0 0
      %411 = vmatpush1.bf16.msra.mxu0 0
      %412 = vmatprep.subr.bf16.mxu0 0
      %413 = vmatpush1.bf16.msra.mxu0 %v355
      %414 = vmatprep.subr.bf16.mxu0 0
      %415 = vmatpush2.bf16.msra.mxu0 0
      %416 = vmatprep.subr.bf16.mxu0 0
      %417 = vmatpush2.bf16.msra.mxu0 0
      %418 = vmatprep.subr.bf16.mxu0 0
      %419 = vmatpush2.bf16.msra.mxu0 0
      %420 = vmatprep.subr.bf16.mxu0 0
      %421 = vmatpush2.bf16.msra.mxu0 0
      %422 = vmatprep.subr.bf16.mxu0 0
      %423 = vmatpush2.bf16.msra.mxu0 0
      %424 = vmatprep.subr.bf16.mxu0 0
      %425 = vmatpush2.bf16.msra.mxu0 0
      %426 = vmatprep.subr.bf16.mxu0 0
      %427 = vmatpush2.bf16.msra.mxu0 0
      %428 = vmatprep.subr.bf16.mxu0 0
      %429 = vmatpush2.bf16.msra.mxu0 0
      %430 = vmatprep.mubr.bf16.mxu0 0
      %431 = vmatmul.mubr.bf16.gmra.mxu0 %v345
      %v432 = vpop.f32.mrf.mxu0
      %v433 = vadd.f32 0.0, %v432
      %v434 = vpop.f32.mrf.mxu0
      %v435 = vpop.f32.mrf.mxu0
      %v436 = vpop.f32.mrf.mxu0
      %437 = vdwg.mxu0
      %v438 = vadd.f32 %v321, %v392
      %v439 = vadd.f32 %v322, %v394
      %v440 = vadd.f32 %v323, %v433
      %s441 = scalar_lea.vmem %s272, 4
      %v442 = vld [vmem:[%s441] sm:$0xf]
      %v443 = vld [vmem:[#allocation2] sm:$0xff]
      %v445 = vcombine.high %v443, %v443
      %v447 = vunpack.c.l.s4 1983009808
      %v448 = vunpack.c.0.s8 %v447
      %v449 = vlaneseq
      %v450 = vshrl.u32 %v449, 7
      %v451 = vsub.s32 %v448, %v450
      %v452 = vrot.slane %v443, %v451
      %v454 = vunpack.c.l.s4 1983009808
      %v455 = vunpack.c.0.s8 %v454
      %v456 = vlaneseq
      %v457 = vshrl.u32 %v456, 7
      %v458 = vsub.s32 %v455, %v457
      %v459 = vrot.slane %v445, %v458
      %v460 = vcombine.high %v452, %v452
      %v461 = vcombine.high %v459, %v459
      %462 = vrot.lane.b32.xlu0 %v452, 127
      %v463 = vpop.permute.xlu0 %462
      %464 = vrot.lane.b32.xlu0 %v460, 127
      %v465 = vpop.permute.xlu0 %464
      %466 = vrot.lane.b32.xlu0 %v459, 127
      %v467 = vpop.permute.xlu0 %466
      %468 = vrot.lane.b32.xlu0 %v461, 127
      %v469 = vpop.permute.xlu0 %468
      %vm470 = vcmask 1039360
      %v471 = vsel %vm470, %v463, %v465
      %v472 = vsel %vm470, %v465, %v467
      %v473 = vsel %vm470, %v467, %v469
      %v475 = vsel %vm343, %v442, 0
      %v478 = vsel %vm347, %v471, 0
      %v481 = vsel %vm347, %v472, 0
      %v484 = vsel %vm347, %v473, 0
      %486 = vmatprep.subr.bf16.mxu0 0
      %487 = vmatpush1.bf16.msra.mxu0 0
      %488 = vmatprep.subr.bf16.mxu0 0
      %489 = vmatpush1.bf16.msra.mxu0 0
      %490 = vmatprep.subr.bf16.mxu0 0
      %491 = vmatpush1.bf16.msra.mxu0 0
      %492 = vmatprep.subr.bf16.mxu0 0
      %493 = vmatpush1.bf16.msra.mxu0 0
      %494 = vmatprep.subr.bf16.mxu0 0
      %495 = vmatpush1.bf16.msra.mxu0 0
      %496 = vmatprep.subr.bf16.mxu0 0
      %497 = vmatpush1.bf16.msra.mxu0 0
      %498 = vmatprep.subr.bf16.mxu0 0
      %499 = vmatpush1.bf16.msra.mxu0 0
      %500 = vmatprep.subr.bf16.mxu0 %v481
      %501 = vmatpush1.bf16.msra.mxu0 %v478
      %502 = vmatprep.subr.bf16.mxu0 0
      %503 = vmatpush2.bf16.msra.mxu0 0
      %504 = vmatprep.subr.bf16.mxu0 0
      %505 = vmatpush2.bf16.msra.mxu0 0
      %506 = vmatprep.subr.bf16.mxu0 0
      %507 = vmatpush2.bf16.msra.mxu0 0
      %508 = vmatprep.subr.bf16.mxu0 0
      %509 = vmatpush2.bf16.msra.mxu0 0
      %510 = vmatprep.subr.bf16.mxu0 0
      %511 = vmatpush2.bf16.msra.mxu0 0
      %512 = vmatprep.subr.bf16.mxu0 0
      %513 = vmatpush2.bf16.msra.mxu0 0
      %514 = vmatprep.subr.bf16.mxu0 0
      %515 = vmatpush2.bf16.msra.mxu0 0
      %516 = vmatprep.subr.bf16.mxu0 0
      %517 = vmatpush2.bf16.msra.mxu0 0
      %518 = vmatprep.mubr.bf16.mxu0 0
      %519 = vmatmul.mubr.bf16.gmra.mxu0 %v475
      %v520 = vpop.f32.mrf.mxu0
      %v521 = vadd.f32 0.0, %v520
      %v522 = vpop.f32.mrf.mxu0
      %v523 = vadd.f32 0.0, %v522
      %v524 = vpop.f32.mrf.mxu0
      %v525 = vpop.f32.mrf.mxu0
      %526 = vdwg.mxu0
      %527 = vmatprep.subr.bf16.mxu0 0
      %528 = vmatpush1.bf16.msra.mxu0 0
      %529 = vmatprep.subr.bf16.mxu0 0
      %530 = vmatpush1.bf16.msra.mxu0 0
      %531 = vmatprep.subr.bf16.mxu0 0
      %532 = vmatpush1.bf16.msra.mxu0 0
      %533 = vmatprep.subr.bf16.mxu0 0
      %534 = vmatpush1.bf16.msra.mxu0 0
      %535 = vmatprep.subr.bf16.mxu0 0
      %536 = vmatpush1.bf16.msra.mxu0 0
      %537 = vmatprep.subr.bf16.mxu0 0
      %538 = vmatpush1.bf16.msra.mxu0 0
      %539 = vmatprep.subr.bf16.mxu0 0
      %540 = vmatpush1.bf16.msra.mxu0 0
      %541 = vmatprep.subr.bf16.mxu0 0
      %542 = vmatpush1.bf16.msra.mxu0 %v484
      %543 = vmatprep.subr.bf16.mxu0 0
      %544 = vmatpush2.bf16.msra.mxu0 0
      %545 = vmatprep.subr.bf16.mxu0 0
      %546 = vmatpush2.bf16.msra.mxu0 0
      %547 = vmatprep.subr.bf16.mxu0 0
      %548 = vmatpush2.bf16.msra.mxu0 0
      %549 = vmatprep.subr.bf16.mxu0 0
      %550 = vmatpush2.bf16.msra.mxu0 0
      %551 = vmatprep.subr.bf16.mxu0 0
      %552 = vmatpush2.bf16.msra.mxu0 0
      %553 = vmatprep.subr.bf16.mxu0 0
      %554 = vmatpush2.bf16.msra.mxu0 0
      %555 = vmatprep.subr.bf16.mxu0 0
      %556 = vmatpush2.bf16.msra.mxu0 0
      %557 = vmatprep.subr.bf16.mxu0 0
      %558 = vmatpush2.bf16.msra.mxu0 0
      %559 = vmatprep.mubr.bf16.mxu0 0
      %560 = vmatmul.mubr.bf16.gmra.mxu0 %v475
      %v561 = vpop.f32.mrf.mxu0
      %v562 = vadd.f32 0.0, %v561
      %v563 = vpop.f32.mrf.mxu0
      %v564 = vpop.f32.mrf.mxu0
      %v565 = vpop.f32.mrf.mxu0
      %566 = vdwg.mxu0
      %v567 = vadd.f32 %v438, %v521
      %v568 = vadd.f32 %v439, %v523
      %v569 = vadd.f32 %v440, %v562
      %s570 = scalar_lea.vmem %s272, 8
      %v571 = vld [vmem:[%s570] sm:$0xf]
      %v572 = vld [vmem:[#allocation2] sm:$0xff]
      %v574 = vcombine.high %v572, %v572
      %v576 = vunpack.c.l.s4 1983009808
      %v577 = vunpack.c.0.s8 %v576
      %v578 = vlaneseq
      %v579 = vshrl.u32 %v578, 7
      %v580 = vsub.s32 %v577, %v579
      %v581 = vrot.slane %v572, %v580
      %v583 = vunpack.c.l.s4 1983009808
      %v584 = vunpack.c.0.s8 %v583
      %v585 = vlaneseq
      %v586 = vshrl.u32 %v585, 7
      %v587 = vsub.s32 %v584, %v586
      %v588 = vrot.slane %v574, %v587
      %v589 = vcombine.high %v581, %v581
      %v590 = vcombine.high %v588, %v588
      %591 = vrot.lane.b32.xlu0 %v581, 126
      %v592 = vpop.permute.xlu0 %591
      %593 = vrot.lane.b32.xlu0 %v589, 126
      %v594 = vpop.permute.xlu0 %593
      %595 = vrot.lane.b32.xlu0 %v588, 126
      %v596 = vpop.permute.xlu0 %595
      %597 = vrot.lane.b32.xlu0 %v590, 126
      %v598 = vpop.permute.xlu0 %597
      %vm599 = vcmask 1031168
      %v600 = vsel %vm599, %v592, %v594
      %v601 = vsel %vm599, %v594, %v596
      %v602 = vsel %vm599, %v596, %v598
      %v604 = vsel %vm343, %v571, 0
      %v607 = vsel %vm347, %v600, 0
      %v610 = vsel %vm347, %v601, 0
      %v613 = vsel %vm347, %v602, 0
      %615 = vmatprep.subr.bf16.mxu0 0
      %616 = vmatpush1.bf16.msra.mxu0 0
      %617 = vmatprep.subr.bf16.mxu0 0
      %618 = vmatpush1.bf16.msra.mxu0 0
      %619 = vmatprep.subr.bf16.mxu0 0
      %620 = vmatpush1.bf16.msra.mxu0 0
      %621 = vmatprep.subr.bf16.mxu0 0
      %622 = vmatpush1.bf16.msra.mxu0 0
      %623 = vmatprep.subr.bf16.mxu0 0
      %624 = vmatpush1.bf16.msra.mxu0 0
      %625 = vmatprep.subr.bf16.mxu0 0
      %626 = vmatpush1.bf16.msra.mxu0 0
      %627 = vmatprep.subr.bf16.mxu0 0
      %628 = vmatpush1.bf16.msra.mxu0 0
      %629 = vmatprep.subr.bf16.mxu0 %v610
      %630 = vmatpush1.bf16.msra.mxu0 %v607
      %631 = vmatprep.subr.bf16.mxu0 0
      %632 = vmatpush2.bf16.msra.mxu0 0
      %633 = vmatprep.subr.bf16.mxu0 0
      %634 = vmatpush2.bf16.msra.mxu0 0
      %635 = vmatprep.subr.bf16.mxu0 0
      %636 = vmatpush2.bf16.msra.mxu0 0
      %637 = vmatprep.subr.bf16.mxu0 0
      %638 = vmatpush2.bf16.msra.mxu0 0
      %639 = vmatprep.subr.bf16.mxu0 0
      %640 = vmatpush2.bf16.msra.mxu0 0
      %641 = vmatprep.subr.bf16.mxu0 0
      %642 = vmatpush2.bf16.msra.mxu0 0
      %643 = vmatprep.subr.bf16.mxu0 0
      %644 = vmatpush2.bf16.msra.mxu0 0
      %645 = vmatprep.subr.bf16.mxu0 0
      %646 = vmatpush2.bf16.msra.mxu0 0
      %647 = vmatprep.mubr.bf16.mxu0 0
      %648 = vmatmul.mubr.bf16.gmra.mxu0 %v604
      %v649 = vpop.f32.mrf.mxu0
      %v650 = vadd.f32 0.0, %v649
      %v651 = vpop.f32.mrf.mxu0
      %v652 = vadd.f32 0.0, %v651
      %v653 = vpop.f32.mrf.mxu0
      %v654 = vpop.f32.mrf.mxu0
      %655 = vdwg.mxu0
      %656 = vmatprep.subr.bf16.mxu0 0
      %657 = vmatpush1.bf16.msra.mxu0 0
      %658 = vmatprep.subr.bf16.mxu0 0
      %659 = vmatpush1.bf16.msra.mxu0 0
      %660 = vmatprep.subr.bf16.mxu0 0
      %661 = vmatpush1.bf16.msra.mxu0 0
      %662 = vmatprep.subr.bf16.mxu0 0
      %663 = vmatpush1.bf16.msra.mxu0 0
      %664 = vmatprep.subr.bf16.mxu0 0
      %665 = vmatpush1.bf16.msra.mxu0 0
      %666 = vmatprep.subr.bf16.mxu0 0
      %667 = vmatpush1.bf16.msra.mxu0 0
      %668 = vmatprep.subr.bf16.mxu0 0
      %669 = vmatpush1.bf16.msra.mxu0 0
      %670 = vmatprep.subr.bf16.mxu0 0
      %671 = vmatpush1.bf16.msra.mxu0 %v613
      %672 = vmatprep.subr.bf16.mxu0 0
      %673 = vmatpush2.bf16.msra.mxu0 0
      %674 = vmatprep.subr.bf16.mxu0 0
      %675 = vmatpush2.bf16.msra.mxu0 0
      %676 = vmatprep.subr.bf16.mxu0 0
      %677 = vmatpush2.bf16.msra.mxu0 0
      %678 = vmatprep.subr.bf16.mxu0 0
      %679 = vmatpush2.bf16.msra.mxu0 0
      %680 = vmatprep.subr.bf16.mxu0 0
      %681 = vmatpush2.bf16.msra.mxu0 0
      %682 = vmatprep.subr.bf16.mxu0 0
      %683 = vmatpush2.bf16.msra.mxu0 0
      %684 = vmatprep.subr.bf16.mxu0 0
      %685 = vmatpush2.bf16.msra.mxu0 0
      %686 = vmatprep.subr.bf16.mxu0 0
      %687 = vmatpush2.bf16.msra.mxu0 0
      %688 = vmatprep.mubr.bf16.mxu0 0
      %689 = vmatmul.mubr.bf16.gmra.mxu0 %v604
      %v690 = vpop.f32.mrf.mxu0
      %v691 = vadd.f32 0.0, %v690
      %v692 = vpop.f32.mrf.mxu0
      %v693 = vpop.f32.mrf.mxu0
      %v694 = vpop.f32.mrf.mxu0
      %695 = vdwg.mxu0
      %v696 = vadd.f32 %v567, %v650
      %v697 = vadd.f32 %v568, %v652
      %v698 = vadd.f32 %v569, %v691
      %s699 = scalar_lea.vmem %s272, 12
      %v700 = vld [vmem:[%s699] sm:$0xf]
      %v701 = vld [vmem:[#allocation2] sm:$0xff]
      %v703 = vcombine.high %v701, %v701
      %v705 = vunpack.c.l.s4 1983009808
      %v706 = vunpack.c.0.s8 %v705
      %v707 = vlaneseq
      %v708 = vshrl.u32 %v707, 7
      %v709 = vsub.s32 %v706, %v708
      %v710 = vrot.slane %v701, %v709
      %v712 = vunpack.c.l.s4 1983009808
      %v713 = vunpack.c.0.s8 %v712
      %v714 = vlaneseq
      %v715 = vshrl.u32 %v714, 7
      %v716 = vsub.s32 %v713, %v715
      %v717 = vrot.slane %v703, %v716
      %v718 = vcombine.high %v710, %v710
      %v719 = vcombine.high %v717, %v717
      %720 = vrot.lane.b32.xlu0 %v710, 110
      %v721 = vpop.permute.xlu0 %720
      %722 = vrot.lane.b32.xlu0 %v718, 110
      %v723 = vpop.permute.xlu0 %722
      %724 = vrot.lane.b32.xlu0 %v717, 110
      %v725 = vpop.permute.xlu0 %724
      %726 = vrot.lane.b32.xlu0 %v719, 110
      %v727 = vpop.permute.xlu0 %726
      %vm728 = vcmask 900096
      %v729 = vsel %vm728, %v721, %v723
      %v730 = vsel %vm728, %v723, %v725
      %v731 = vsel %vm728, %v725, %v727
      %v733 = vsel %vm343, %v700, 0
      %v736 = vsel %vm347, %v729, 0
      %v739 = vsel %vm347, %v730, 0
      %v742 = vsel %vm347, %v731, 0
      %744 = vmatprep.subr.bf16.mxu0 0
      %745 = vmatpush1.bf16.msra.mxu0 0
      %746 = vmatprep.subr.bf16.mxu0 0
      %747 = vmatpush1.bf16.msra.mxu0 0
      %748 = vmatprep.subr.bf16.mxu0 0
      %749 = vmatpush1.bf16.msra.mxu0 0
      %750 = vmatprep.subr.bf16.mxu0 0
      %751 = vmatpush1.bf16.msra.mxu0 0
      %752 = vmatprep.subr.bf16.mxu0 0
      %753 = vmatpush1.bf16.msra.mxu0 0
      %754 = vmatprep.subr.bf16.mxu0 0
      %755 = vmatpush1.bf16.msra.mxu0 0
      %756 = vmatprep.subr.bf16.mxu0 0
      %757 = vmatpush1.bf16.msra.mxu0 0
      %758 = vmatprep.subr.bf16.mxu0 %v739
      %759 = vmatpush1.bf16.msra.mxu0 %v736
      %760 = vmatprep.subr.bf16.mxu0 0
      %761 = vmatpush2.bf16.msra.mxu0 0
      %762 = vmatprep.subr.bf16.mxu0 0
      %763 = vmatpush2.bf16.msra.mxu0 0
      %764 = vmatprep.subr.bf16.mxu0 0
      %765 = vmatpush2.bf16.msra.mxu0 0
      %766 = vmatprep.subr.bf16.mxu0 0
      %767 = vmatpush2.bf16.msra.mxu0 0
      %768 = vmatprep.subr.bf16.mxu0 0
      %769 = vmatpush2.bf16.msra.mxu0 0
      %770 = vmatprep.subr.bf16.mxu0 0
      %771 = vmatpush2.bf16.msra.mxu0 0
      %772 = vmatprep.subr.bf16.mxu0 0
      %773 = vmatpush2.bf16.msra.mxu0 0
      %774 = vmatprep.subr.bf16.mxu0 0
      %775 = vmatpush2.bf16.msra.mxu0 0
      %776 = vmatprep.mubr.bf16.mxu0 0
      %777 = vmatmul.mubr.bf16.gmra.mxu0 %v733
      %v778 = vpop.f32.mrf.mxu0
      %v779 = vadd.f32 0.0, %v778
      %v780 = vpop.f32.mrf.mxu0
      %v781 = vadd.f32 0.0, %v780
      %v782 = vpop.f32.mrf.mxu0
      %v783 = vpop.f32.mrf.mxu0
      %784 = vdwg.mxu0
      %785 = vmatprep.subr.bf16.mxu0 0
      %786 = vmatpush1.bf16.msra.mxu0 0
      %787 = vmatprep.subr.bf16.mxu0 0
      %788 = vmatpush1.bf16.msra.mxu0 0
      %789 = vmatprep.subr.bf16.mxu0 0
      %790 = vmatpush1.bf16.msra.mxu0 0
      %791 = vmatprep.subr.bf16.mxu0 0
      %792 = vmatpush1.bf16.msra.mxu0 0
      %793 = vmatprep.subr.bf16.mxu0 0
      %794 = vmatpush1.bf16.msra.mxu0 0
      %795 = vmatprep.subr.bf16.mxu0 0
      %796 = vmatpush1.bf16.msra.mxu0 0
      %797 = vmatprep.subr.bf16.mxu0 0
      %798 = vmatpush1.bf16.msra.mxu0 0
      %799 = vmatprep.subr.bf16.mxu0 0
      %800 = vmatpush1.bf16.msra.mxu0 %v742
      %801 = vmatprep.subr.bf16.mxu0 0
      %802 = vmatpush2.bf16.msra.mxu0 0
      %803 = vmatprep.subr.bf16.mxu0 0
      %804 = vmatpush2.bf16.msra.mxu0 0
      %805 = vmatprep.subr.bf16.mxu0 0
      %806 = vmatpush2.bf16.msra.mxu0 0
      %807 = vmatprep.subr.bf16.mxu0 0
      %808 = vmatpush2.bf16.msra.mxu0 0
      %809 = vmatprep.subr.bf16.mxu0 0
      %810 = vmatpush2.bf16.msra.mxu0 0
      %811 = vmatprep.subr.bf16.mxu0 0
      %812 = vmatpush2.bf16.msra.mxu0 0
      %813 = vmatprep.subr.bf16.mxu0 0
      %814 = vmatpush2.bf16.msra.mxu0 0
      %815 = vmatprep.subr.bf16.mxu0 0
      %816 = vmatpush2.bf16.msra.mxu0 0
      %817 = vmatprep.mubr.bf16.mxu0 0
      %818 = vmatmul.mubr.bf16.gmra.mxu0 %v733
      %v819 = vpop.f32.mrf.mxu0
      %v820 = vadd.f32 0.0, %v819
      %v821 = vpop.f32.mrf.mxu0
      %v822 = vpop.f32.mrf.mxu0
      %v823 = vpop.f32.mrf.mxu0
      %824 = vdwg.mxu0
      %v825 = vadd.f32 %v696, %v779
      %v826 = vadd.f32 %v697, %v781
      %v827 = vadd.f32 %v698, %v820
      %s828 = scalar_lea.vmem %s272, 16
      %v829 = vld [vmem:[%s828] sm:$0xf]
      %v830 = vld [vmem:[#allocation2] sm:$0xff]
      %v832 = vcombine.high %v830, %v830
      %v834 = vunpack.c.l.s4 1983009808
      %v835 = vunpack.c.0.s8 %v834
      %v836 = vlaneseq
      %v837 = vshrl.u32 %v836, 7
      %v838 = vsub.s32 %v835, %v837
      %v839 = vrot.slane %v830, %v838
      %v841 = vunpack.c.l.s4 1983009808
      %v842 = vunpack.c.0.s8 %v841
      %v843 = vlaneseq
      %v844 = vshrl.u32 %v843, 7
      %v845 = vsub.s32 %v842, %v844
      %v846 = vrot.slane %v832, %v845
      %v847 = vcombine.high %v839, %v839
      %v848 = vcombine.high %v846, %v846
      %849 = vrot.lane.b32.xlu0 %v839, 109
      %v850 = vpop.permute.xlu0 %849
      %851 = vrot.lane.b32.xlu0 %v847, 109
      %v852 = vpop.permute.xlu0 %851
      %853 = vrot.lane.b32.xlu0 %v846, 109
      %v854 = vpop.permute.xlu0 %853
      %855 = vrot.lane.b32.xlu0 %v848, 109
      %v856 = vpop.permute.xlu0 %855
      %vm857 = vcmask 891904
      %v858 = vsel %vm857, %v850, %v852
      %v859 = vsel %vm857, %v852, %v854
      %v860 = vsel %vm857, %v854, %v856
      %v862 = vsel %vm343, %v829, 0
      %v865 = vsel %vm347, %v858, 0
      %v868 = vsel %vm347, %v859, 0
      %v871 = vsel %vm347, %v860, 0
      %873 = vmatprep.subr.bf16.mxu0 0
      %874 = vmatpush1.bf16.msra.mxu0 0
      %875 = vmatprep.subr.bf16.mxu0 0
      %876 = vmatpush1.bf16.msra.mxu0 0
      %877 = vmatprep.subr.bf16.mxu0 0
      %878 = vmatpush1.bf16.msra.mxu0 0
      %879 = vmatprep.subr.bf16.mxu0 0
      %880 = vmatpush1.bf16.msra.mxu0 0
      %881 = vmatprep.subr.bf16.mxu0 0
      %882 = vmatpush1.bf16.msra.mxu0 0
      %883 = vmatprep.subr.bf16.mxu0 0
      %884 = vmatpush1.bf16.msra.mxu0 0
      %885 = vmatprep.subr.bf16.mxu0 0
      %886 = vmatpush1.bf16.msra.mxu0 0
      %887 = vmatprep.subr.bf16.mxu0 %v868
      %888 = vmatpush1.bf16.msra.mxu0 %v865
      %889 = vmatprep.subr.bf16.mxu0 0
      %890 = vmatpush2.bf16.msra.mxu0 0
      %891 = vmatprep.subr.bf16.mxu0 0
      %892 = vmatpush2.bf16.msra.mxu0 0
      %893 = vmatprep.subr.bf16.mxu0 0
      %894 = vmatpush2.bf16.msra.mxu0 0
      %895 = vmatprep.subr.bf16.mxu0 0
      %896 = vmatpush2.bf16.msra.mxu0 0
      %897 = vmatprep.subr.bf16.mxu0 0
      %898 = vmatpush2.bf16.msra.mxu0 0
      %899 = vmatprep.subr.bf16.mxu0 0
      %900 = vmatpush2.bf16.msra.mxu0 0
      %901 = vmatprep.subr.bf16.mxu0 0
      %902 = vmatpush2.bf16.msra.mxu0 0
      %903 = vmatprep.subr.bf16.mxu0 0
      %904 = vmatpush2.bf16.msra.mxu0 0
      %905 = vmatprep.mubr.bf16.mxu0 0
      %906 = vmatmul.mubr.bf16.gmra.mxu0 %v862
      %v907 = vpop.f32.mrf.mxu0
      %v908 = vadd.f32 0.0, %v907
      %v909 = vpop.f32.mrf.mxu0
      %v910 = vadd.f32 0.0, %v909
      %v911 = vpop.f32.mrf.mxu0
      %v912 = vpop.f32.mrf.mxu0
      %913 = vdwg.mxu0
      %914 = vmatprep.subr.bf16.mxu0 0
      %915 = vmatpush1.bf16.msra.mxu0 0
      %916 = vmatprep.subr.bf16.mxu0 0
      %917 = vmatpush1.bf16.msra.mxu0 0
      %918 = vmatprep.subr.bf16.mxu0 0
      %919 = vmatpush1.bf16.msra.mxu0 0
      %920 = vmatprep.subr.bf16.mxu0 0
      %921 = vmatpush1.bf16.msra.mxu0 0
      %922 = vmatprep.subr.bf16.mxu0 0
      %923 = vmatpush1.bf16.msra.mxu0 0
      %924 = vmatprep.subr.bf16.mxu0 0
      %925 = vmatpush1.bf16.msra.mxu0 0
      %926 = vmatprep.subr.bf16.mxu0 0
      %927 = vmatpush1.bf16.msra.mxu0 0
      %928 = vmatprep.subr.bf16.mxu0 0
      %929 = vmatpush1.bf16.msra.mxu0 %v871
      %930 = vmatprep.subr.bf16.mxu0 0
      %931 = vmatpush2.bf16.msra.mxu0 0
      %932 = vmatprep.subr.bf16.mxu0 0
      %933 = vmatpush2.bf16.msra.mxu0 0
      %934 = vmatprep.subr.bf16.mxu0 0
      %935 = vmatpush2.bf16.msra.mxu0 0
      %936 = vmatprep.subr.bf16.mxu0 0
      %937 = vmatpush2.bf16.msra.mxu0 0
      %938 = vmatprep.subr.bf16.mxu0 0
      %939 = vmatpush2.bf16.msra.mxu0 0
      %940 = vmatprep.subr.bf16.mxu0 0
      %941 = vmatpush2.bf16.msra.mxu0 0
      %942 = vmatprep.subr.bf16.mxu0 0
      %943 = vmatpush2.bf16.msra.mxu0 0
      %944 = vmatprep.subr.bf16.mxu0 0
      %945 = vmatpush2.bf16.msra.mxu0 0
      %946 = vmatprep.mubr.bf16.mxu0 0
      %947 = vmatmul.mubr.bf16.gmra.mxu0 %v862
      %v948 = vpop.f32.mrf.mxu0
      %v949 = vadd.f32 0.0, %v948
      %v950 = vpop.f32.mrf.mxu0
      %v951 = vpop.f32.mrf.mxu0
      %v952 = vpop.f32.mrf.mxu0
      %953 = vdwg.mxu0
      %v954 = vadd.f32 %v825, %v908
      %v955 = vadd.f32 %v826, %v910
      %v956 = vadd.f32 %v827, %v949
      %s957 = scalar_lea.vmem %s272, 20
      %v958 = vld [vmem:[%s957] sm:$0xf]
      %v959 = vld [vmem:[#allocation2] sm:$0xff]
      %v961 = vcombine.high %v959, %v959
      %v963 = vunpack.c.l.s4 1983009808
      %v964 = vunpack.c.0.s8 %v963
      %v965 = vlaneseq
      %v966 = vshrl.u32 %v965, 7
      %v967 = vsub.s32 %v964, %v966
      %v968 = vrot.slane %v959, %v967
      %v970 = vunpack.c.l.s4 1983009808
      %v971 = vunpack.c.0.s8 %v970
      %v972 = vlaneseq
      %v973 = vshrl.u32 %v972, 7
      %v974 = vsub.s32 %v971, %v973
      %v975 = vrot.slane %v961, %v974
      %v976 = vcombine.high %v968, %v968
      %v977 = vcombine.high %v975, %v975
      %978 = vrot.lane.b32.xlu0 %v968, 108
      %v979 = vpop.permute.xlu0 %978
      %980 = vrot.lane.b32.xlu0 %v976, 108
      %v981 = vpop.permute.xlu0 %980
      %982 = vrot.lane.b32.xlu0 %v975, 108
      %v983 = vpop.permute.xlu0 %982
      %984 = vrot.lane.b32.xlu0 %v977, 108
      %v985 = vpop.permute.xlu0 %984
      %vm986 = vcmask 883712
      %v987 = vsel %vm986, %v979, %v981
      %v988 = vsel %vm986, %v981, %v983
      %v989 = vsel %vm986, %v983, %v985
      %v991 = vsel %vm343, %v958, 0
      %v994 = vsel %vm347, %v987, 0
      %v997 = vsel %vm347, %v988, 0
      %v1000 = vsel %vm347, %v989, 0
      %1002 = vmatprep.subr.bf16.mxu0 0
      %1003 = vmatpush1.bf16.msra.mxu0 0
      %1004 = vmatprep.subr.bf16.mxu0 0
      %1005 = vmatpush1.bf16.msra.mxu0 0
      %1006 = vmatprep.subr.bf16.mxu0 0
      %1007 = vmatpush1.bf16.msra.mxu0 0
      %1008 = vmatprep.subr.bf16.mxu0 0
      %1009 = vmatpush1.bf16.msra.mxu0 0
      %1010 = vmatprep.subr.bf16.mxu0 0
      %1011 = vmatpush1.bf16.msra.mxu0 0
      %1012 = vmatprep.subr.bf16.mxu0 0
      %1013 = vmatpush1.bf16.msra.mxu0 0
      %1014 = vmatprep.subr.bf16.mxu0 0
      %1015 = vmatpush1.bf16.msra.mxu0 0
      %1016 = vmatprep.subr.bf16.mxu0 %v997
      %1017 = vmatpush1.bf16.msra.mxu0 %v994
      %1018 = vmatprep.subr.bf16.mxu0 0
      %1019 = vmatpush2.bf16.msra.mxu0 0
      %1020 = vmatprep.subr.bf16.mxu0 0
      %1021 = vmatpush2.bf16.msra.mxu0 0
      %1022 = vmatprep.subr.bf16.mxu0 0
      %1023 = vmatpush2.bf16.msra.mxu0 0
      %1024 = vmatprep.subr.bf16.mxu0 0
      %1025 = vmatpush2.bf16.msra.mxu0 0
      %1026 = vmatprep.subr.bf16.mxu0 0
      %1027 = vmatpush2.bf16.msra.mxu0 0
      %1028 = vmatprep.subr.bf16.mxu0 0
      %1029 = vmatpush2.bf16.msra.mxu0 0
      %1030 = vmatprep.subr.bf16.mxu0 0
      %1031 = vmatpush2.bf16.msra.mxu0 0
      %1032 = vmatprep.subr.bf16.mxu0 0
      %1033 = vmatpush2.bf16.msra.mxu0 0
      %1034 = vmatprep.mubr.bf16.mxu0 0
      %1035 = vmatmul.mubr.bf16.gmra.mxu0 %v991
      %v1036 = vpop.f32.mrf.mxu0
      %v1037 = vadd.f32 0.0, %v1036
      %v1038 = vpop.f32.mrf.mxu0
      %v1039 = vadd.f32 0.0, %v1038
      %v1040 = vpop.f32.mrf.mxu0
      %v1041 = vpop.f32.mrf.mxu0
      %1042 = vdwg.mxu0
      %1043 = vmatprep.subr.bf16.mxu0 0
      %1044 = vmatpush1.bf16.msra.mxu0 0
      %1045 = vmatprep.subr.bf16.mxu0 0
      %1046 = vmatpush1.bf16.msra.mxu0 0
      %1047 = vmatprep.subr.bf16.mxu0 0
      %1048 = vmatpush1.bf16.msra.mxu0 0
      %1049 = vmatprep.subr.bf16.mxu0 0
      %1050 = vmatpush1.bf16.msra.mxu0 0
      %1051 = vmatprep.subr.bf16.mxu0 0
      %1052 = vmatpush1.bf16.msra.mxu0 0
      %1053 = vmatprep.subr.bf16.mxu0 0
      %1054 = vmatpush1.bf16.msra.mxu0 0
      %1055 = vmatprep.subr.bf16.mxu0 0
      %1056 = vmatpush1.bf16.msra.mxu0 0
      %1057 = vmatprep.subr.bf16.mxu0 0
      %1058 = vmatpush1.bf16.msra.mxu0 %v1000
      %1059 = vmatprep.subr.bf16.mxu0 0
      %1060 = vmatpush2.bf16.msra.mxu0 0
      %1061 = vmatprep.subr.bf16.mxu0 0
      %1062 = vmatpush2.bf16.msra.mxu0 0
      %1063 = vmatprep.subr.bf16.mxu0 0
      %1064 = vmatpush2.bf16.msra.mxu0 0
      %1065 = vmatprep.subr.bf16.mxu0 0
      %1066 = vmatpush2.bf16.msra.mxu0 0
      %1067 = vmatprep.subr.bf16.mxu0 0
      %1068 = vmatpush2.bf16.msra.mxu0 0
      %1069 = vmatprep.subr.bf16.mxu0 0
      %1070 = vmatpush2.bf16.msra.mxu0 0
      %1071 = vmatprep.subr.bf16.mxu0 0
      %1072 = vmatpush2.bf16.msra.mxu0 0
      %1073 = vmatprep.subr.bf16.mxu0 0
      %1074 = vmatpush2.bf16.msra.mxu0 0
      %1075 = vmatprep.mubr.bf16.mxu0 0
      %1076 = vmatmul.mubr.bf16.gmra.mxu0 %v991
      %v1077 = vpop.f32.mrf.mxu0
      %v1078 = vadd.f32 0.0, %v1077
      %v1079 = vpop.f32.mrf.mxu0
      %v1080 = vpop.f32.mrf.mxu0
      %v1081 = vpop.f32.mrf.mxu0
      %1082 = vdwg.mxu0
      %v1083 = vadd.f32 %v954, %v1037
      %v1084 = vadd.f32 %v955, %v1039
      %v1085 = vadd.f32 %v956, %v1078
      %s1086 = scalar_lea.vmem %s272, 24
      %v1087 = vld [vmem:[%s1086] sm:$0xf]
      %v1088 = vld [vmem:[#allocation2] sm:$0xff]
      %v1090 = vcombine.high %v1088, %v1088
      %v1092 = vunpack.c.l.s4 1983009808
      %v1093 = vunpack.c.0.s8 %v1092
      %v1094 = vlaneseq
      %v1095 = vshrl.u32 %v1094, 7
      %v1096 = vsub.s32 %v1093, %v1095
      %v1097 = vrot.slane %v1088, %v1096
      %v1099 = vunpack.c.l.s4 1983009808
      %v1100 = vunpack.c.0.s8 %v1099
      %v1101 = vlaneseq
      %v1102 = vshrl.u32 %v1101, 7
      %v1103 = vsub.s32 %v1100, %v1102
      %v1104 = vrot.slane %v1090, %v1103
      %v1105 = vcombine.high %v1097, %v1097
      %v1106 = vcombine.high %v1104, %v1104
      %1107 = vrot.lane.b32.xlu0 %v1097, 92
      %v1108 = vpop.permute.xlu0 %1107
      %1109 = vrot.lane.b32.xlu0 %v1105, 92
      %v1110 = vpop.permute.xlu0 %1109
      %1111 = vrot.lane.b32.xlu0 %v1104, 92
      %v1112 = vpop.permute.xlu0 %1111
      %1113 = vrot.lane.b32.xlu0 %v1106, 92
      %v1114 = vpop.permute.xlu0 %1113
      %vm1115 = vcmask 752640
      %v1116 = vsel %vm1115, %v1108, %v1110
      %v1117 = vsel %vm1115, %v1110, %v1112
      %v1118 = vsel %vm1115, %v1112, %v1114
      %v1120 = vsel %vm343, %v1087, 0
      %v1123 = vsel %vm347, %v1116, 0
      %v1126 = vsel %vm347, %v1117, 0
      %v1129 = vsel %vm347, %v1118, 0
      %1131 = vmatprep.subr.bf16.mxu0 0
      %1132 = vmatpush1.bf16.msra.mxu0 0
      %1133 = vmatprep.subr.bf16.mxu0 0
      %1134 = vmatpush1.bf16.msra.mxu0 0
      %1135 = vmatprep.subr.bf16.mxu0 0
      %1136 = vmatpush1.bf16.msra.mxu0 0
      %1137 = vmatprep.subr.bf16.mxu0 0
      %1138 = vmatpush1.bf16.msra.mxu0 0
      %1139 = vmatprep.subr.bf16.mxu0 0
      %1140 = vmatpush1.bf16.msra.mxu0 0
      %1141 = vmatprep.subr.bf16.mxu0 0
      %1142 = vmatpush1.bf16.msra.mxu0 0
      %1143 = vmatprep.subr.bf16.mxu0 0
      %1144 = vmatpush1.bf16.msra.mxu0 0
      %1145 = vmatprep.subr.bf16.mxu0 %v1126
      %1146 = vmatpush1.bf16.msra.mxu0 %v1123
      %1147 = vmatprep.subr.bf16.mxu0 0
      %1148 = vmatpush2.bf16.msra.mxu0 0
      %1149 = vmatprep.subr.bf16.mxu0 0
      %1150 = vmatpush2.bf16.msra.mxu0 0
      %1151 = vmatprep.subr.bf16.mxu0 0
      %1152 = vmatpush2.bf16.msra.mxu0 0
      %1153 = vmatprep.subr.bf16.mxu0 0
      %1154 = vmatpush2.bf16.msra.mxu0 0
      %1155 = vmatprep.subr.bf16.mxu0 0
      %1156 = vmatpush2.bf16.msra.mxu0 0
      %1157 = vmatprep.subr.bf16.mxu0 0
      %1158 = vmatpush2.bf16.msra.mxu0 0
      %1159 = vmatprep.subr.bf16.mxu0 0
      %1160 = vmatpush2.bf16.msra.mxu0 0
      %1161 = vmatprep.subr.bf16.mxu0 0
      %1162 = vmatpush2.bf16.msra.mxu0 0
      %1163 = vmatprep.mubr.bf16.mxu0 0
      %1164 = vmatmul.mubr.bf16.gmra.mxu0 %v1120
      %v1165 = vpop.f32.mrf.mxu0
      %v1166 = vadd.f32 0.0, %v1165
      %v1167 = vpop.f32.mrf.mxu0
      %v1168 = vadd.f32 0.0, %v1167
      %v1169 = vpop.f32.mrf.mxu0
      %v1170 = vpop.f32.mrf.mxu0
      %1171 = vdwg.mxu0
      %1172 = vmatprep.subr.bf16.mxu0 0
      %1173 = vmatpush1.bf16.msra.mxu0 0
      %1174 = vmatprep.subr.bf16.mxu0 0
      %1175 = vmatpush1.bf16.msra.mxu0 0
      %1176 = vmatprep.subr.bf16.mxu0 0
      %1177 = vmatpush1.bf16.msra.mxu0 0
      %1178 = vmatprep.subr.bf16.mxu0 0
      %1179 = vmatpush1.bf16.msra.mxu0 0
      %1180 = vmatprep.subr.bf16.mxu0 0
      %1181 = vmatpush1.bf16.msra.mxu0 0
      %1182 = vmatprep.subr.bf16.mxu0 0
      %1183 = vmatpush1.bf16.msra.mxu0 0
      %1184 = vmatprep.subr.bf16.mxu0 0
      %1185 = vmatpush1.bf16.msra.mxu0 0
      %1186 = vmatprep.subr.bf16.mxu0 0
      %1187 = vmatpush1.bf16.msra.mxu0 %v1129
      %1188 = vmatprep.subr.bf16.mxu0 0
      %1189 = vmatpush2.bf16.msra.mxu0 0
      %1190 = vmatprep.subr.bf16.mxu0 0
      %1191 = vmatpush2.bf16.msra.mxu0 0
      %1192 = vmatprep.subr.bf16.mxu0 0
      %1193 = vmatpush2.bf16.msra.mxu0 0
      %1194 = vmatprep.subr.bf16.mxu0 0
      %1195 = vmatpush2.bf16.msra.mxu0 0
      %1196 = vmatprep.subr.bf16.mxu0 0
      %1197 = vmatpush2.bf16.msra.mxu0 0
      %1198 = vmatprep.subr.bf16.mxu0 0
      %1199 = vmatpush2.bf16.msra.mxu0 0
      %1200 = vmatprep.subr.bf16.mxu0 0
      %1201 = vmatpush2.bf16.msra.mxu0 0
      %1202 = vmatprep.subr.bf16.mxu0 0
      %1203 = vmatpush2.bf16.msra.mxu0 0
      %1204 = vmatprep.mubr.bf16.mxu0 0
      %1205 = vmatmul.mubr.bf16.gmra.mxu0 %v1120
      %v1206 = vpop.f32.mrf.mxu0
      %v1207 = vadd.f32 0.0, %v1206
      %v1208 = vpop.f32.mrf.mxu0
      %v1209 = vpop.f32.mrf.mxu0
      %v1210 = vpop.f32.mrf.mxu0
      %1211 = vdwg.mxu0
      %v1212 = vadd.f32 %v1083, %v1166
      %v1213 = vadd.f32 %v1084, %v1168
      %v1214 = vadd.f32 %v1085, %v1207
      %s1215 = scalar_lea.vmem %s272, 28
      %v1216 = vld [vmem:[%s1215] sm:$0xf]
      %v1217 = vld [vmem:[#allocation2] sm:$0xff]
      %v1219 = vcombine.high %v1217, %v1217
      %v1221 = vunpack.c.l.s4 1983009808
      %v1222 = vunpack.c.0.s8 %v1221
      %v1223 = vlaneseq
      %v1224 = vshrl.u32 %v1223, 7
      %v1225 = vsub.s32 %v1222, %v1224
      %v1226 = vrot.slane %v1217, %v1225
      %v1228 = vunpack.c.l.s4 1983009808
      %v1229 = vunpack.c.0.s8 %v1228
      %v1230 = vlaneseq
      %v1231 = vshrl.u32 %v1230, 7
      %v1232 = vsub.s32 %v1229, %v1231
      %v1233 = vrot.slane %v1219, %v1232
      %v1234 = vcombine.high %v1226, %v1226
      %v1235 = vcombine.high %v1233, %v1233
      %1236 = vrot.lane.b32.xlu0 %v1226, 91
      %v1237 = vpop.permute.xlu0 %1236
      %1238 = vrot.lane.b32.xlu0 %v1234, 91
      %v1239 = vpop.permute.xlu0 %1238
      %1240 = vrot.lane.b32.xlu0 %v1233, 91
      %v1241 = vpop.permute.xlu0 %1240
      %1242 = vrot.lane.b32.xlu0 %v1235, 91
      %v1243 = vpop.permute.xlu0 %1242
      %vm1244 = vcmask 744448
      %v1245 = vsel %vm1244, %v1237, %v1239
      %v1246 = vsel %vm1244, %v1239, %v1241
      %v1247 = vsel %vm1244, %v1241, %v1243
      %v1249 = vsel %vm343, %v1216, 0
      %v1252 = vsel %vm347, %v1245, 0
      %v1255 = vsel %vm347, %v1246, 0
      %v1258 = vsel %vm347, %v1247, 0
      %1260 = vmatprep.subr.bf16.mxu0 0
      %1261 = vmatpush1.bf16.msra.mxu0 0
      %1262 = vmatprep.subr.bf16.mxu0 0
      %1263 = vmatpush1.bf16.msra.mxu0 0
      %1264 = vmatprep.subr.bf16.mxu0 0
      %1265 = vmatpush1.bf16.msra.mxu0 0
      %1266 = vmatprep.subr.bf16.mxu0 0
      %1267 = vmatpush1.bf16.msra.mxu0 0
      %1268 = vmatprep.subr.bf16.mxu0 0
      %1269 = vmatpush1.bf16.msra.mxu0 0
      %1270 = vmatprep.subr.bf16.mxu0 0
      %1271 = vmatpush1.bf16.msra.mxu0 0
      %1272 = vmatprep.subr.bf16.mxu0 0
      %1273 = vmatpush1.bf16.msra.mxu0 0
      %1274 = vmatprep.subr.bf16.mxu0 %v1255
      %1275 = vmatpush1.bf16.msra.mxu0 %v1252
      %1276 = vmatprep.subr.bf16.mxu0 0
      %1277 = vmatpush2.bf16.msra.mxu0 0
      %1278 = vmatprep.subr.bf16.mxu0 0
      %1279 = vmatpush2.bf16.msra.mxu0 0
      %1280 = vmatprep.subr.bf16.mxu0 0
      %1281 = vmatpush2.bf16.msra.mxu0 0
      %1282 = vmatprep.subr.bf16.mxu0 0
      %1283 = vmatpush2.bf16.msra.mxu0 0
      %1284 = vmatprep.subr.bf16.mxu0 0
      %1285 = vmatpush2.bf16.msra.mxu0 0
      %1286 = vmatprep.subr.bf16.mxu0 0
      %1287 = vmatpush2.bf16.msra.mxu0 0
      %1288 = vmatprep.subr.bf16.mxu0 0
      %1289 = vmatpush2.bf16.msra.mxu0 0
      %1290 = vmatprep.subr.bf16.mxu0 0
      %1291 = vmatpush2.bf16.msra.mxu0 0
      %1292 = vmatprep.mubr.bf16.mxu0 0
      %1293 = vmatmul.mubr.bf16.gmra.mxu0 %v1249
      %v1294 = vpop.f32.mrf.mxu0
      %v1295 = vadd.f32 0.0, %v1294
      %v1296 = vpop.f32.mrf.mxu0
      %v1297 = vadd.f32 0.0, %v1296
      %v1298 = vpop.f32.mrf.mxu0
      %v1299 = vpop.f32.mrf.mxu0
      %1300 = vdwg.mxu0
      %1301 = vmatprep.subr.bf16.mxu0 0
      %1302 = vmatpush1.bf16.msra.mxu0 0
      %1303 = vmatprep.subr.bf16.mxu0 0
      %1304 = vmatpush1.bf16.msra.mxu0 0
      %1305 = vmatprep.subr.bf16.mxu0 0
      %1306 = vmatpush1.bf16.msra.mxu0 0
      %1307 = vmatprep.subr.bf16.mxu0 0
      %1308 = vmatpush1.bf16.msra.mxu0 0
      %1309 = vmatprep.subr.bf16.mxu0 0
      %1310 = vmatpush1.bf16.msra.mxu0 0
      %1311 = vmatprep.subr.bf16.mxu0 0
      %1312 = vmatpush1.bf16.msra.mxu0 0
      %1313 = vmatprep.subr.bf16.mxu0 0
      %1314 = vmatpush1.bf16.msra.mxu0 0
      %1315 = vmatprep.subr.bf16.mxu0 0
      %1316 = vmatpush1.bf16.msra.mxu0 %v1258
      %1317 = vmatprep.subr.bf16.mxu0 0
      %1318 = vmatpush2.bf16.msra.mxu0 0
      %1319 = vmatprep.subr.bf16.mxu0 0
      %1320 = vmatpush2.bf16.msra.mxu0 0
      %1321 = vmatprep.subr.bf16.mxu0 0
      %1322 = vmatpush2.bf16.msra.mxu0 0
      %1323 = vmatprep.subr.bf16.mxu0 0
      %1324 = vmatpush2.bf16.msra.mxu0 0
      %1325 = vmatprep.subr.bf16.mxu0 0
      %1326 = vmatpush2.bf16.msra.mxu0 0
      %1327 = vmatprep.subr.bf16.mxu0 0
      %1328 = vmatpush2.bf16.msra.mxu0 0
      %1329 = vmatprep.subr.bf16.mxu0 0
      %1330 = vmatpush2.bf16.msra.mxu0 0
      %1331 = vmatprep.subr.bf16.mxu0 0
      %1332 = vmatpush2.bf16.msra.mxu0 0
      %1333 = vmatprep.mubr.bf16.mxu0 0
      %1334 = vmatmul.mubr.bf16.gmra.mxu0 %v1249
      %v1335 = vpop.f32.mrf.mxu0
      %v1336 = vadd.f32 0.0, %v1335
      %v1337 = vpop.f32.mrf.mxu0
      %v1338 = vpop.f32.mrf.mxu0
      %v1339 = vpop.f32.mrf.mxu0
      %1340 = vdwg.mxu0
      %v1341 = vadd.f32 %v1212, %v1295
      %v1342 = vadd.f32 %v1213, %v1297
      %v1343 = vadd.f32 %v1214, %v1336
      %s1344 = scalar_lea.vmem %s272, 32
      %v1345 = vld [vmem:[%s1344] sm:$0xf]
      %v1346 = vld [vmem:[#allocation2] sm:$0xff]
      %v1348 = vcombine.high %v1346, %v1346
      %v1350 = vunpack.c.l.s4 1983009808
      %v1351 = vunpack.c.0.s8 %v1350
      %v1352 = vlaneseq
      %v1353 = vshrl.u32 %v1352, 7
      %v1354 = vsub.s32 %v1351, %v1353
      %v1355 = vrot.slane %v1346, %v1354
      %v1357 = vunpack.c.l.s4 1983009808
      %v1358 = vunpack.c.0.s8 %v1357
      %v1359 = vlaneseq
      %v1360 = vshrl.u32 %v1359, 7
      %v1361 = vsub.s32 %v1358, %v1360
      %v1362 = vrot.slane %v1348, %v1361
      %v1363 = vcombine.high %v1355, %v1355
      %v1364 = vcombine.high %v1362, %v1362
      %1365 = vrot.lane.b32.xlu0 %v1355, 90
      %v1366 = vpop.permute.xlu0 %1365
      %1367 = vrot.lane.b32.xlu0 %v1363, 90
      %v1368 = vpop.permute.xlu0 %1367
      %1369 = vrot.lane.b32.xlu0 %v1362, 90
      %v1370 = vpop.permute.xlu0 %1369
      %1371 = vrot.lane.b32.xlu0 %v1364, 90
      %v1372 = vpop.permute.xlu0 %1371
      %vm1373 = vcmask 736256
      %v1374 = vsel %vm1373, %v1366, %v1368
      %v1375 = vsel %vm1373, %v1368, %v1370
      %v1376 = vsel %vm1373, %v1370, %v1372
      %v1378 = vsel %vm343, %v1345, 0
      %v1381 = vsel %vm347, %v1374, 0
      %v1384 = vsel %vm347, %v1375, 0
      %v1387 = vsel %vm347, %v1376, 0
      %1389 = vmatprep.subr.bf16.mxu0 0
      %1390 = vmatpush1.bf16.msra.mxu0 0
      %1391 = vmatprep.subr.bf16.mxu0 0
      %1392 = vmatpush1.bf16.msra.mxu0 0
      %1393 = vmatprep.subr.bf16.mxu0 0
      %1394 = vmatpush1.bf16.msra.mxu0 0
      %1395 = vmatprep.subr.bf16.mxu0 0
      %1396 = vmatpush1.bf16.msra.mxu0 0
      %1397 = vmatprep.subr.bf16.mxu0 0
      %1398 = vmatpush1.bf16.msra.mxu0 0
      %1399 = vmatprep.subr.bf16.mxu0 0
      %1400 = vmatpush1.bf16.msra.mxu0 0
      %1401 = vmatprep.subr.bf16.mxu0 0
      %1402 = vmatpush1.bf16.msra.mxu0 0
      %1403 = vmatprep.subr.bf16.mxu0 %v1384
      %1404 = vmatpush1.bf16.msra.mxu0 %v1381
      %1405 = vmatprep.subr.bf16.mxu0 0
      %1406 = vmatpush2.bf16.msra.mxu0 0
      %1407 = vmatprep.subr.bf16.mxu0 0
      %1408 = vmatpush2.bf16.msra.mxu0 0
      %1409 = vmatprep.subr.bf16.mxu0 0
      %1410 = vmatpush2.bf16.msra.mxu0 0
      %1411 = vmatprep.subr.bf16.mxu0 0
      %1412 = vmatpush2.bf16.msra.mxu0 0
      %1413 = vmatprep.subr.bf16.mxu0 0
      %1414 = vmatpush2.bf16.msra.mxu0 0
      %1415 = vmatprep.subr.bf16.mxu0 0
      %1416 = vmatpush2.bf16.msra.mxu0 0
      %1417 = vmatprep.subr.bf16.mxu0 0
      %1418 = vmatpush2.bf16.msra.mxu0 0
      %1419 = vmatprep.subr.bf16.mxu0 0
      %1420 = vmatpush2.bf16.msra.mxu0 0
      %1421 = vmatprep.mubr.bf16.mxu0 0
      %1422 = vmatmul.mubr.bf16.gmra.mxu0 %v1378
      %v1423 = vpop.f32.mrf.mxu0
      %v1424 = vadd.f32 0.0, %v1423
      %v1425 = vpop.f32.mrf.mxu0
      %v1426 = vadd.f32 0.0, %v1425
      %v1427 = vpop.f32.mrf.mxu0
      %v1428 = vpop.f32.mrf.mxu0
      %1429 = vdwg.mxu0
      %1430 = vmatprep.subr.bf16.mxu0 0
      %1431 = vmatpush1.bf16.msra.mxu0 0
      %1432 = vmatprep.subr.bf16.mxu0 0
      %1433 = vmatpush1.bf16.msra.mxu0 0
      %1434 = vmatprep.subr.bf16.mxu0 0
      %1435 = vmatpush1.bf16.msra.mxu0 0
      %1436 = vmatprep.subr.bf16.mxu0 0
      %1437 = vmatpush1.bf16.msra.mxu0 0
      %1438 = vmatprep.subr.bf16.mxu0 0
      %1439 = vmatpush1.bf16.msra.mxu0 0
      %1440 = vmatprep.subr.bf16.mxu0 0
      %1441 = vmatpush1.bf16.msra.mxu0 0
      %1442 = vmatprep.subr.bf16.mxu0 0
      %1443 = vmatpush1.bf16.msra.mxu0 0
      %1444 = vmatprep.subr.bf16.mxu0 0
      %1445 = vmatpush1.bf16.msra.mxu0 %v1387
      %1446 = vmatprep.subr.bf16.mxu0 0
      %1447 = vmatpush2.bf16.msra.mxu0 0
      %1448 = vmatprep.subr.bf16.mxu0 0
      %1449 = vmatpush2.bf16.msra.mxu0 0
      %1450 = vmatprep.subr.bf16.mxu0 0
      %1451 = vmatpush2.bf16.msra.mxu0 0
      %1452 = vmatprep.subr.bf16.mxu0 0
      %1453 = vmatpush2.bf16.msra.mxu0 0
      %1454 = vmatprep.subr.bf16.mxu0 0
      %1455 = vmatpush2.bf16.msra.mxu0 0
      %1456 = vmatprep.subr.bf16.mxu0 0
      %1457 = vmatpush2.bf16.msra.mxu0 0
      %1458 = vmatprep.subr.bf16.mxu0 0
      %1459 = vmatpush2.bf16.msra.mxu0 0
      %1460 = vmatprep.subr.bf16.mxu0 0
      %1461 = vmatpush2.bf16.msra.mxu0 0
      %1462 = vmatprep.mubr.bf16.mxu0 0
      %1463 = vmatmul.mubr.bf16.gmra.mxu0 %v1378
      %v1464 = vpop.f32.mrf.mxu0
      %v1465 = vadd.f32 0.0, %v1464
      %v1466 = vpop.f32.mrf.mxu0
      %v1467 = vpop.f32.mrf.mxu0
      %v1468 = vpop.f32.mrf.mxu0
      %1469 = vdwg.mxu0
      %v1470 = vadd.f32 %v1341, %v1424
      %v1471 = vadd.f32 %v1342, %v1426
      %v1472 = vadd.f32 %v1343, %v1465
      %1473 = vst [vmem:[#allocation3] sm:$0xff] %v1470
      %1474 = vst [vmem:[#allocation3 + $0x8] sm:$0xff] %v1471
      %1475 = vst [vmem:[#allocation3 + $0x10] sm:$0xff] %v1472
      // Predicated region
      $region41: #{conv_layer_forward.1} parent=35 // pred_check
        %p1476 = pneg %p310
      $region42: #{conv_layer_forward.1} parent=35 // pred_check_branch
        %1478 = sbr.rel (%p1476) target = $region44
      $region43: #{conv_layer_forward.1} parent=35 // pred_region
        %v1479 = vld [vmem:[#allocation3] sm:$0xff]
        %v1480 = vld [vmem:[#allocation3 + $0x8] sm:$0xff]
        %v1481 = vld [vmem:[#allocation3 + $0x10] sm:$0xff]
        %v1482 = vld [vmem:[%s1] sm:$0xff]
        %1484 = vset.pattern.permute.xlu0 0
        %1485 = vperm.xlu0 %1484, %v1482
        %v1486 = vpop.permute.xlu0 %1485
        %v1488 = vadd.f32 %v1479, %v1486
        %v1489 = vadd.f32 %v1480, %v1486
        %v1490 = vadd.f32 %v1481, %v1486
        %1491 = vst [vmem:[%s307] sm:$0xff] %v1488
        %1492 = vst [vmem:[%s307 + $0x8] sm:$0xff] %v1489
        %1493 = vst [vmem:[%s307 + $0x10] sm:$0xff] %v1490
      $region44: #{conv_layer_forward.1} parent=35 // pred_fallthru
        _
      %s1494 = smul.u32 3, %s19
      %p1495 = scmp.lt.s32.totalorder %s1494, 5
      %s1496 = scalar_select %p1495, %s1494, 5
      %s1497 = smul.addr %s1496, 8
      %s1498 = scalar_lea.vmem %s4, %s1497
      // Predicated region
      $region45: #{conv_layer_forward.1} parent=35 // pred_check
        %p1499 = pneg %p152
      $region46: #{conv_layer_forward.1} parent=35 // pred_check_branch
        %1501 = sbr.rel (%p1499) target = $region48
      $region47: #{conv_layer_forward.1} parent=35 // pred_region
        %s1502 = smul.u32 3, %s19
      $region48: #{conv_layer_forward.1} parent=35 // pred_fallthru
        _
    $region36: #{conv_layer_forward.1} parent=5 // pred_fallthru
      _
    %p1503 = scmp.le.s32.totalorder 2, %s10
    // Predicated region
    $region49: #{conv_layer_forward.1} parent=5 // pred_check
      %p1504 = pneg %p1503
    $region50: #{conv_layer_forward.1} parent=5 // pred_check_branch
      %1506 = sbr.rel (%p1504) target = $region52
    $region51: #{conv_layer_forward.1} parent=5 // pred_region
      %s1507 = ssub.s32 %s10, 2
      // Predicated region
      $region53: #{conv_layer_forward.1} parent=51 // pred_check
        %p1508 = pneg %p158
      $region54: #{conv_layer_forward.1} parent=51 // pred_check_branch
        %1510 = sbr.rel (%p1508) target = $region56
      $region55: #{conv_layer_forward.1} parent=51 // pred_region
        %s1511 = smul.u32 3, %s21
        %p1512 = scmp.lt.s32.totalorder %s1511, 5
        %s1513 = scalar_select %p1512, %s1511, 5
        %s1514 = smul.addr %s1513, 8
        %s1515 = scalar_lea.vmem %s4, %s1514
      $region56: #{conv_layer_forward.1} parent=51 // pred_fallthru
        _
    $region52: #{conv_layer_forward.1} parent=5 // pred_fallthru
      _
  $region6: #{conv_layer_forward.1} parent=0 // loop_footer
    %s14 = sadd.s32 1, %s10
  $region7: #{conv_layer_forward.1} parent=0 // loop_footer_branch
    %9 = sbr.rel target = $region3
  $region8: #{conv_layer_forward.1} parent=0 // loop_exit
    _

</llo_original>
